<compile_context>
chip_gen: v7x
topology: tpu7x:2x2x1
jax: 0.10.0
libtpu: 0.0.40
codegen_flags: <defaults>
</compile_context>

<pallas_src>
import jax
import jax.numpy as jnp
from jax.experimental import pallas as pl
from jax.experimental.pallas import tpu as pltpu


def _round_up(n: int, m: int) -> int:
    return ((n + m - 1) // m) * m


def value_net_kernel(x_ref, w1_ref, b1_ref, w2_ref, b2_ref, o_ref):
    # fc1 on the MXU; always accumulate in f32 regardless of operand dtype.
    h = jnp.dot(x_ref[...], w1_ref[...], preferred_element_type=jnp.float32)
    h = jnp.maximum(h + b1_ref[...], 0.0)            # bias + ReLU on the VPU (f32)
    # fc2 has N == 1: elementwise multiply + lane (XLU) reduce, keeping the
    # batch on the sublane axis.  The (TB, 1) column is stored directly into
    # the (B, 1) output -- no sublane->lane relayout, no degenerate MXU matmul.
    v = jnp.sum(h * w2_ref[...], axis=-1, keepdims=True)
    o_ref[...] = (v + b2_ref[0]).astype(o_ref.dtype)


def value_net_forward(x, w1, b1, w2_row, b2, *, block_batch=8192):
    """ValueNet forward.

    x:      (B, S) float32 or bfloat16 (producer decides; no cast here)
    w1:     (S, H) float32   fc1 weight, stored as W^T relative to torch
    b1:     (1, H) float32
    w2_row: (1, H) float32   fc2 weight as a row vector
    b2:     (1,)   float32
    returns (B, 1) float32
    """
    B, S = x.shape
    H = w1.shape[1]
    assert w1.shape == (S, H) and b1.shape == (1, H)
    assert w2_row.shape == (1, H) and b2.shape == (1,)

    # ---- weight-side layout plumbing only (tiny, no pass over x) ----
    Hp = _round_up(H, 128)                 # lane-dense hidden; zero cols cancel
    if Hp != H:
        w1 = jnp.pad(w1, ((0, 0), (0, Hp - H)))
        b1 = jnp.pad(b1, ((0, 0), (0, Hp - H)))
        w2_row = jnp.pad(w2_row, ((0, 0), (0, Hp - H)))
    if x.dtype != w1.dtype:
        # Match the MXU operand dtypes (e.g. producer gives bf16 x).  Weights
        # are tiny, so this cast is negligible; accumulation stays f32.
        w1 = w1.astype(x.dtype)

    # Batch tiling: single full-array step when it fits the budget, otherwise
    # TB-row blocks (multiple of 8/128) with a masked partial last block.
    if B <= block_batch:
        TB = B
    else:
        TB = _round_up(block_batch, 128)
    grid = (pl.cdiv(B, TB),)

    itemsize = jnp.dtype(x.dtype).itemsize
    cost = pl.CostEstimate(
        flops=2 * B * S * Hp + 4 * B * Hp,
        transcendentals=0,
        bytes_accessed=B * S * itemsize + S * Hp * itemsize + 3 * Hp * 4 + B * 4,
    )

    out = pl.pallas_call(
        value_net_kernel,
        out_shape=jax.ShapeDtypeStruct((B, 1), jnp.float32),
        grid_spec=pl.GridSpec(
            grid=grid,
            in_specs=[
                pl.BlockSpec((TB, S), lambda i: (i, 0)),    # x: batch-tiled
                pl.BlockSpec((S, Hp), lambda i: (0, 0)),    # w1: VMEM-resident
                pl.BlockSpec((1, Hp), lambda i: (0, 0)),    # b1: VMEM-resident
                pl.BlockSpec((1, Hp), lambda i: (0, 0)),    # w2 row: VMEM-resident
                pl.BlockSpec(memory_space=pltpu.MemorySpace.SMEM),  # b2 scalar
            ],
            out_specs=pl.BlockSpec((TB, 1), lambda i: (i, 0)),
        ),
        compiler_params=pltpu.CompilerParams(
            # Batch tiles are independent -> sharded across TensorCores on v7x.
            dimension_semantics=("parallel",),
        ),
        cost_estimate=cost,
    )(x, w1, b1, w2_row, b2)
    return out


def init_params(key, state_dim, hidden_dim):
    """torch.nn.Linear default init: U(-1/sqrt(fan_in), 1/sqrt(fan_in))."""
    k1, k2, k3, k4 = jax.random.split(key, 4)
    bound1 = 1.0 / jnp.sqrt(jnp.float32(state_dim))
    bound2 = 1.0 / jnp.sqrt(jnp.float32(hidden_dim))
    # fc1 weight stored as (in, out) = W^T; fc2 weight stored as a (1, H) row.
    w1 = jax.random.uniform(k1, (state_dim, hidden_dim), jnp.float32, -bound1, bound1)
    b1 = jax.random.uniform(k2, (1, hidden_dim), jnp.float32, -bound1, bound1)
    w2_row = jax.random.uniform(k3, (1, hidden_dim), jnp.float32, -bound2, bound2)
    b2 = jax.random.uniform(k4, (1,), jnp.float32, -bound2, bound2)
    return w1, b1, w2_row, b2


def value_net_ref(x, w1, b1, w2_row, b2):
    """Pure-JAX reference for correctness check."""
    h = jnp.maximum(x.astype(jnp.float32) @ w1 + b1, 0.0)
    return h @ w2_row.T + b2


if __name__ == "__main__":
    # Deliberately non-multiple batch; hidden_dim=32 exercises lane padding.
    batch, state_dim, hidden_dim = 1000, 16, 32

    key = jax.random.PRNGKey(0)
    kx, kp = jax.random.split(key)
    x = jax.random.normal(kx, (batch, state_dim), jnp.float32)
    w1, b1, w2_row, b2 = init_params(kp, state_dim, hidden_dim)

    ref = value_net_ref(x, w1, b1, w2_row, b2)

    fwd = jax.jit(value_net_forward, static_argnames=("block_batch",))

    # Single-step path (B <= block_batch): one full-array block, no padding.
    out = jax.block_until_ready(fwd(x, w1, b1, w2_row, b2))
    assert out.shape == (batch, 1), out.shape
    assert jnp.allclose(out, ref, atol=1e-5, rtol=1e-5), "f32 single-step mismatch"

    # Multi-step path with a partial last block (1000 = 3*256 + 232) to
    # exercise the masked boundary handling and the parallel grid.
    out_tiled = jax.block_until_ready(fwd(x, w1, b1, w2_row, b2, block_batch=256))
    assert out_tiled.shape == (batch, 1), out_tiled.shape
    assert jnp.allclose(out_tiled, ref, atol=1e-5, rtol=1e-5), "f32 tiled mismatch"

    # bf16-producer path: x arrives already in bf16 (no wrapper-side cast pass
    # over x inside the forward); valid on v5e/v6e/v7x, f32 accumulation.
    x_bf16 = x.astype(jnp.bfloat16)
    out_bf16 = jax.block_until_ready(fwd(x_bf16, w1, b1, w2_row, b2))
    assert out_bf16.shape == (batch, 1), out_bf16.shape
    assert jnp.allclose(out_bf16, ref, atol=5e-2, rtol=5e-2), "bf16 mismatch"

    print("KERNEL_OK")
</pallas_src>

<mosaic_0001>
module attributes {stable_mosaic.version = 11 : i64} {
  func.func @value_net_kernel(%arg0: i32, %arg1: memref<1000x16xf32, #tpu.memory_space<vmem>>, %arg2: memref<16x128xf32, #tpu.memory_space<vmem>>, %arg3: memref<1x128xf32, #tpu.memory_space<vmem>>, %arg4: memref<1x128xf32, #tpu.memory_space<vmem>>, %arg5: memref<1xf32, #tpu.memory_space<smem>>, %arg6: memref<1000x1xf32, #tpu.memory_space<vmem>>) attributes {dimension_semantics = [#tpu.dimension_semantics<parallel>], iteration_bounds = array<i64: 1>, scalar_prefetch = 0 : i64, scratch_operands = 0 : i64, tpu.core_type = #tpu.core_type<tc>, window_params = [{transform_indices = @transform_0, window_bounds = array<i64: 1000, 16>}, {pipeline_mode = #tpu.pipeline_mode<synchronous>, transform_indices = @transform_1, window_bounds = array<i64: 16, 128>}, {pipeline_mode = #tpu.pipeline_mode<synchronous>, transform_indices = @transform_2, window_bounds = array<i64: 1, 128>}, {pipeline_mode = #tpu.pipeline_mode<synchronous>, transform_indices = @transform_3, window_bounds = array<i64: 1, 128>}, {transform_indices = @transform_4, window_bounds = array<i64: 1>}, {transform_indices = @transform_5, window_bounds = array<i64: 1000, 1>}]} {
    %c0 = arith.constant 0 : index
    %c0_0 = arith.constant 0 : index
    %0 = vector.load %arg1[%c0, %c0_0] : memref<1000x16xf32, #tpu.memory_space<vmem>>, vector<1000x16xf32>
    %c0_1 = arith.constant 0 : index
    %c0_2 = arith.constant 0 : index
    %1 = vector.load %arg2[%c0_1, %c0_2] : memref<16x128xf32, #tpu.memory_space<vmem>>, vector<16x128xf32>
    %cst = arith.constant dense<0.000000e+00> : vector<1000x128xf32>
    %2 = tpu.matmul %0, %1, %cst {dimension_numbers = #tpu.dot_dimension_numbers<[1], [0], [0], [1], [0, 0, 1, 1], [], []>} : vector<1000x16xf32>, vector<16x128xf32>, vector<1000x128xf32> -> vector<1000x128xf32>
    %c0_3 = arith.constant 0 : index
    %c0_4 = arith.constant 0 : index
    %3 = vector.load %arg3[%c0_3, %c0_4] : memref<1x128xf32, #tpu.memory_space<vmem>>, vector<1x128xf32>
    %4 = vector.broadcast %3 : vector<1x128xf32> to vector<1000x128xf32>
    %5 = arith.addf %2, %4 : vector<1000x128xf32>
    %cst_5 = arith.constant 0.000000e+00 : f32
    %6 = vector.broadcast %cst_5 : f32 to vector<1000x128xf32>
    %7 = arith.maximumf %5, %6 : vector<1000x128xf32>
    %c0_6 = arith.constant 0 : index
    %c0_7 = arith.constant 0 : index
    %8 = vector.load %arg4[%c0_6, %c0_7] : memref<1x128xf32, #tpu.memory_space<vmem>>, vector<1x128xf32>
    %9 = vector.broadcast %8 : vector<1x128xf32> to vector<1000x128xf32>
    %10 = arith.mulf %7, %9 : vector<1000x128xf32>
    %cst_8 = arith.constant dense<0.000000e+00> : vector<1000xf32>
    %11 = vector.multi_reduction <add>, %10, %cst_8 [1] : vector<1000x128xf32> to vector<1000xf32>
    %12 = vector.shape_cast %11 : vector<1000xf32> to vector<1000x1xf32>
    %c0_9 = arith.constant 0 : index
    %13 = memref.load %arg5[%c0_9] : memref<1xf32, #tpu.memory_space<smem>>
    %14 = vector.broadcast %13 : f32 to vector<1000x1xf32>
    %15 = arith.addf %12, %14 : vector<1000x1xf32>
    %c0_10 = arith.constant 0 : index
    %c0_11 = arith.constant 0 : index
    %16 = vector.load %arg6[%c0_10, %c0_11] : memref<1000x1xf32, #tpu.memory_space<vmem>>, vector<1000x1xf32>
    tpu.vector_store %arg6[%c0_10, %c0_11], %15 {strides = array<i32>} : memref<1000x1xf32, #tpu.memory_space<vmem>>, vector<1000x1xf32>,
    return
  }
  func.func @transform_0(%arg0: i32) -> (i32, i32) {
    %c0_i32 = arith.constant 0 : i32
    %c0_i32_0 = arith.constant 0 : i32
    return %arg0, %c0_i32 : i32, i32
  }
  func.func @transform_1(%arg0: i32) -> (i32, i32) {
    %c0_i32 = arith.constant 0 : i32
    %c0_i32_0 = arith.constant 0 : i32
    %c0_i32_1 = arith.constant 0 : i32
    return %c0_i32, %c0_i32_0 : i32, i32
  }
  func.func @transform_2(%arg0: i32) -> (i32, i32) {
    %c0_i32 = arith.constant 0 : i32
    %c0_i32_0 = arith.constant 0 : i32
    %c0_i32_1 = arith.constant 0 : i32
    return %c0_i32, %c0_i32_0 : i32, i32
  }
  func.func @transform_3(%arg0: i32) -> (i32, i32) {
    %c0_i32 = arith.constant 0 : i32
    %c0_i32_0 = arith.constant 0 : i32
    %c0_i32_1 = arith.constant 0 : i32
    return %c0_i32, %c0_i32_0 : i32, i32
  }
  func.func @transform_4(%arg0: i32) -> i32 {
    %c0_i32 = arith.constant 0 : i32
    %c0_i32_0 = arith.constant 0 : i32
    return %c0_i32 : i32
  }
  func.func @transform_5(%arg0: i32) -> (i32, i32) {
    %c0_i32 = arith.constant 0 : i32
    %c0_i32_0 = arith.constant 0 : i32
    return %arg0, %c0_i32 : i32, i32
  }
}

</mosaic_0001>

<llo_original>
// kernel: value_net_forward.1
$region0: #{value_net_forward.1}
  #allocation0 [shape = 'u32[]', space=smem, size = 0x4, offset = 0x4, fixed_abs, tag = 'smem constant byte address 0x4 - core index']
  #allocation1 [shape = 'u32[144,128]{1,0:T(1,128)}', space=vmem, size = 0x12000, scoped, tag = 'internal scratch']
  #allocation2 [shape = 'f32[1]{0:T(128)S(6)}', space=smem, size = 0x200, scoped, tag = 'scoped memory for value_net_forward.1']
  %s0 = inlined_call_operand.vmem [shape: f32[1000,16], index: 0, kind: input, shape index: {}]
  %s1 = inlined_call_operand.vmem [shape: f32[16,128], index: 1, kind: input, shape index: {}]
  %s2 = inlined_call_operand.vmem [shape: f32[1,128], index: 2, kind: input, shape index: {}]
  %s3 = inlined_call_operand.vmem [shape: f32[1,128], index: 3, kind: input, shape index: {}]
  %s4 = inlined_call_operand.<no memory space> [shape: f32[1], index: 4, kind: input, shape index: {}]
  %s5 = inlined_call_operand.vmem [shape: f32[1000,1], index: 5, kind: output, shape index: {}]
  %s6 = sld [smem:[#allocation0]]
  $region30: #{value_net_forward.1} parent=0
    _
  %s8 = ssub.s32 1, %s6
  %s9 = scalar_select 0, %s8, %s6
  %10 = sst [smem:[#allocation2]] %s4
  // Predicated region
  $region2: #{value_net_forward.1} parent=0 // pred_check
    _
  $region3: #{value_net_forward.1} parent=0 // pred_check_branch
    %12 = sbr.rel (0) target = $region5
  $region4: #{value_net_forward.1} parent=0 // pred_region
    _
  $region5: #{value_net_forward.1} parent=0 // pred_fallthru
    _
  // Predicated region
  $region6: #{value_net_forward.1} parent=0 // pred_check
    _
  $region7: #{value_net_forward.1} parent=0 // pred_check_branch
    %14 = sbr.rel (0) target = $region9
  $region8: #{value_net_forward.1} parent=0 // pred_region
    _
  $region9: #{value_net_forward.1} parent=0 // pred_fallthru
    _
  // Predicated region
  $region10: #{value_net_forward.1} parent=0 // pred_check
    _
  $region11: #{value_net_forward.1} parent=0 // pred_check_branch
    %16 = sbr.rel (0) target = $region13
  $region12: #{value_net_forward.1} parent=0 // pred_region
    _
  $region13: #{value_net_forward.1} parent=0 // pred_fallthru
    _
  // Predicated region
  $region14: #{value_net_forward.1} parent=0 // pred_check
    _
  $region15: #{value_net_forward.1} parent=0 // pred_check_branch
    %18 = sbr.rel (0) target = $region17
  $region16: #{value_net_forward.1} parent=0 // pred_region
    _
  $region17: #{value_net_forward.1} parent=0 // pred_fallthru
    _
  // Predicated region
  $region18: #{value_net_forward.1} parent=0 // pred_check
    _
  $region19: #{value_net_forward.1} parent=0 // pred_check_branch
    %20 = sbr.rel (0) target = $region21
  $region20: #{value_net_forward.1} parent=0 // pred_region
    _
  $region21: #{value_net_forward.1} parent=0 // pred_fallthru
    _
  %v21 = vld [vmem:[%s0] sm:$0xff]
  %v22 = vld [vmem:[%s0 + $0x8] sm:$0xff]
  %v23 = vld [vmem:[%s0 + $0x10] sm:$0xff]
  %v24 = vld [vmem:[%s0 + $0x18] sm:$0xff]
  %v25 = vld [vmem:[%s0 + $0x20] sm:$0xff]
  %v26 = vld [vmem:[%s0 + $0x28] sm:$0xff]
  %v27 = vld [vmem:[%s0 + $0x30] sm:$0xff]
  %v28 = vld [vmem:[%s0 + $0x38] sm:$0xff]
  %v29 = vld [vmem:[%s0 + $0x40] sm:$0xff]
  %v30 = vld [vmem:[%s0 + $0x48] sm:$0xff]
  %v31 = vld [vmem:[%s0 + $0x50] sm:$0xff]
  %v32 = vld [vmem:[%s0 + $0x58] sm:$0xff]
  %v33 = vld [vmem:[%s0 + $0x60] sm:$0xff]
  %v34 = vld [vmem:[%s0 + $0x68] sm:$0xff]
  %v35 = vld [vmem:[%s0 + $0x70] sm:$0xff]
  %v36 = vld [vmem:[%s0 + $0x78] sm:$0xff]
  %v37 = vld [vmem:[%s0 + $0x80] sm:$0xff]
  %v38 = vld [vmem:[%s0 + $0x88] sm:$0xff]
  %v39 = vld [vmem:[%s0 + $0x90] sm:$0xff]
  %v40 = vld [vmem:[%s0 + $0x98] sm:$0xff]
  %v41 = vld [vmem:[%s0 + $0xa0] sm:$0xff]
  %v42 = vld [vmem:[%s0 + $0xa8] sm:$0xff]
  %v43 = vld [vmem:[%s0 + $0xb0] sm:$0xff]
  %v44 = vld [vmem:[%s0 + $0xb8] sm:$0xff]
  %v45 = vld [vmem:[%s0 + $0xc0] sm:$0xff]
  %v46 = vld [vmem:[%s0 + $0xc8] sm:$0xff]
  %v47 = vld [vmem:[%s0 + $0xd0] sm:$0xff]
  %v48 = vld [vmem:[%s0 + $0xd8] sm:$0xff]
  %v49 = vld [vmem:[%s0 + $0xe0] sm:$0xff]
  %v50 = vld [vmem:[%s0 + $0xe8] sm:$0xff]
  %v51 = vld [vmem:[%s0 + $0xf0] sm:$0xff]
  %v52 = vld [vmem:[%s0 + $0xf8] sm:$0xff]
  %v53 = vld [vmem:[%s0 + $0x100] sm:$0xff]
  %v54 = vld [vmem:[%s0 + $0x108] sm:$0xff]
  %v55 = vld [vmem:[%s0 + $0x110] sm:$0xff]
  %v56 = vld [vmem:[%s0 + $0x118] sm:$0xff]
  %v57 = vld [vmem:[%s0 + $0x120] sm:$0xff]
  %v58 = vld [vmem:[%s0 + $0x128] sm:$0xff]
  %v59 = vld [vmem:[%s0 + $0x130] sm:$0xff]
  %v60 = vld [vmem:[%s0 + $0x138] sm:$0xff]
  %v61 = vld [vmem:[%s0 + $0x140] sm:$0xff]
  %v62 = vld [vmem:[%s0 + $0x148] sm:$0xff]
  %v63 = vld [vmem:[%s0 + $0x150] sm:$0xff]
  %v64 = vld [vmem:[%s0 + $0x158] sm:$0xff]
  %v65 = vld [vmem:[%s0 + $0x160] sm:$0xff]
  %v66 = vld [vmem:[%s0 + $0x168] sm:$0xff]
  %v67 = vld [vmem:[%s0 + $0x170] sm:$0xff]
  %v68 = vld [vmem:[%s0 + $0x178] sm:$0xff]
  %v69 = vld [vmem:[%s0 + $0x180] sm:$0xff]
  %v70 = vld [vmem:[%s0 + $0x188] sm:$0xff]
  %v71 = vld [vmem:[%s0 + $0x190] sm:$0xff]
  %v72 = vld [vmem:[%s0 + $0x198] sm:$0xff]
  %v73 = vld [vmem:[%s0 + $0x1a0] sm:$0xff]
  %v74 = vld [vmem:[%s0 + $0x1a8] sm:$0xff]
  %v75 = vld [vmem:[%s0 + $0x1b0] sm:$0xff]
  %v76 = vld [vmem:[%s0 + $0x1b8] sm:$0xff]
  %v77 = vld [vmem:[%s0 + $0x1c0] sm:$0xff]
  %v78 = vld [vmem:[%s0 + $0x1c8] sm:$0xff]
  %v79 = vld [vmem:[%s0 + $0x1d0] sm:$0xff]
  %v80 = vld [vmem:[%s0 + $0x1d8] sm:$0xff]
  %v81 = vld [vmem:[%s0 + $0x1e0] sm:$0xff]
  %v82 = vld [vmem:[%s0 + $0x1e8] sm:$0xff]
  %v83 = vld [vmem:[%s0 + $0x1f0] sm:$0xff]
  %v84 = vld [vmem:[%s0 + $0x1f8] sm:$0xff]
  %v85 = vld [vmem:[%s0 + $0x200] sm:$0xff]
  %v86 = vld [vmem:[%s0 + $0x208] sm:$0xff]
  %v87 = vld [vmem:[%s0 + $0x210] sm:$0xff]
  %v88 = vld [vmem:[%s0 + $0x218] sm:$0xff]
  %v89 = vld [vmem:[%s0 + $0x220] sm:$0xff]
  %v90 = vld [vmem:[%s0 + $0x228] sm:$0xff]
  %v91 = vld [vmem:[%s0 + $0x230] sm:$0xff]
  %v92 = vld [vmem:[%s0 + $0x238] sm:$0xff]
  %v93 = vld [vmem:[%s0 + $0x240] sm:$0xff]
  %v94 = vld [vmem:[%s0 + $0x248] sm:$0xff]
  %v95 = vld [vmem:[%s0 + $0x250] sm:$0xff]
  %v96 = vld [vmem:[%s0 + $0x258] sm:$0xff]
  %v97 = vld [vmem:[%s0 + $0x260] sm:$0xff]
  %v98 = vld [vmem:[%s0 + $0x268] sm:$0xff]
  %v99 = vld [vmem:[%s0 + $0x270] sm:$0xff]
  %v100 = vld [vmem:[%s0 + $0x278] sm:$0xff]
  %v101 = vld [vmem:[%s0 + $0x280] sm:$0xff]
  %v102 = vld [vmem:[%s0 + $0x288] sm:$0xff]
  %v103 = vld [vmem:[%s0 + $0x290] sm:$0xff]
  %v104 = vld [vmem:[%s0 + $0x298] sm:$0xff]
  %v105 = vld [vmem:[%s0 + $0x2a0] sm:$0xff]
  %v106 = vld [vmem:[%s0 + $0x2a8] sm:$0xff]
  %v107 = vld [vmem:[%s0 + $0x2b0] sm:$0xff]
  %v108 = vld [vmem:[%s0 + $0x2b8] sm:$0xff]
  %v109 = vld [vmem:[%s0 + $0x2c0] sm:$0xff]
  %v110 = vld [vmem:[%s0 + $0x2c8] sm:$0xff]
  %v111 = vld [vmem:[%s0 + $0x2d0] sm:$0xff]
  %v112 = vld [vmem:[%s0 + $0x2d8] sm:$0xff]
  %v113 = vld [vmem:[%s0 + $0x2e0] sm:$0xff]
  %v114 = vld [vmem:[%s0 + $0x2e8] sm:$0xff]
  %v115 = vld [vmem:[%s0 + $0x2f0] sm:$0xff]
  %v116 = vld [vmem:[%s0 + $0x2f8] sm:$0xff]
  %v117 = vld [vmem:[%s0 + $0x300] sm:$0xff]
  %v118 = vld [vmem:[%s0 + $0x308] sm:$0xff]
  %v119 = vld [vmem:[%s0 + $0x310] sm:$0xff]
  %v120 = vld [vmem:[%s0 + $0x318] sm:$0xff]
  %v121 = vld [vmem:[%s0 + $0x320] sm:$0xff]
  %v122 = vld [vmem:[%s0 + $0x328] sm:$0xff]
  %v123 = vld [vmem:[%s0 + $0x330] sm:$0xff]
  %v124 = vld [vmem:[%s0 + $0x338] sm:$0xff]
  %v125 = vld [vmem:[%s0 + $0x340] sm:$0xff]
  %v126 = vld [vmem:[%s0 + $0x348] sm:$0xff]
  %v127 = vld [vmem:[%s0 + $0x350] sm:$0xff]
  %v128 = vld [vmem:[%s0 + $0x358] sm:$0xff]
  %v129 = vld [vmem:[%s0 + $0x360] sm:$0xff]
  %v130 = vld [vmem:[%s0 + $0x368] sm:$0xff]
  %v131 = vld [vmem:[%s0 + $0x370] sm:$0xff]
  %v132 = vld [vmem:[%s0 + $0x378] sm:$0xff]
  %v133 = vld [vmem:[%s0 + $0x380] sm:$0xff]
  %v134 = vld [vmem:[%s0 + $0x388] sm:$0xff]
  %v135 = vld [vmem:[%s0 + $0x390] sm:$0xff]
  %v136 = vld [vmem:[%s0 + $0x398] sm:$0xff]
  %v137 = vld [vmem:[%s0 + $0x3a0] sm:$0xff]
  %v138 = vld [vmem:[%s0 + $0x3a8] sm:$0xff]
  %v139 = vld [vmem:[%s0 + $0x3b0] sm:$0xff]
  %v140 = vld [vmem:[%s0 + $0x3b8] sm:$0xff]
  %v141 = vld [vmem:[%s0 + $0x3c0] sm:$0xff]
  %v142 = vld [vmem:[%s0 + $0x3c8] sm:$0xff]
  %v143 = vld [vmem:[%s0 + $0x3d0] sm:$0xff]
  %v144 = vld [vmem:[%s0 + $0x3d8] sm:$0xff]
  %v145 = vld [vmem:[%s0 + $0x3e0] sm:$0xff]
  %v146 = vld [vmem:[%s1] sm:$0xff]
  %v147 = vld [vmem:[%s1 + $0x8] sm:$0xff]
  %v148 = vld [vmem:[%s2] sm:$0x1]
  %v150 = vlaneseq
  %v151 = vshrl.u32 %v150, 7
  %v152 = vsub.s32 0, %v151
  %v153 = vrot.slane %v148, %v152
  %vm155 = vcmask 130048
  %v157 = vsel %vm155, %v21, 0
  %v160 = vsel %vm155, %v22, 0
  %v163 = vsel %vm155, %v23, 0
  %v166 = vsel %vm155, %v24, 0
  %v169 = vsel %vm155, %v25, 0
  %v172 = vsel %vm155, %v26, 0
  %v175 = vsel %vm155, %v27, 0
  %v178 = vsel %vm155, %v28, 0
  %v181 = vsel %vm155, %v29, 0
  %v184 = vsel %vm155, %v30, 0
  %v187 = vsel %vm155, %v31, 0
  %v190 = vsel %vm155, %v32, 0
  %v193 = vsel %vm155, %v33, 0
  %v196 = vsel %vm155, %v34, 0
  %v199 = vsel %vm155, %v35, 0
  %v202 = vsel %vm155, %v36, 0
  %v205 = vsel %vm155, %v37, 0
  %v208 = vsel %vm155, %v38, 0
  %v211 = vsel %vm155, %v39, 0
  %v214 = vsel %vm155, %v40, 0
  %v217 = vsel %vm155, %v41, 0
  %v220 = vsel %vm155, %v42, 0
  %v223 = vsel %vm155, %v43, 0
  %v226 = vsel %vm155, %v44, 0
  %v229 = vsel %vm155, %v45, 0
  %v232 = vsel %vm155, %v46, 0
  %v235 = vsel %vm155, %v47, 0
  %v238 = vsel %vm155, %v48, 0
  %v241 = vsel %vm155, %v49, 0
  %v244 = vsel %vm155, %v50, 0
  %v247 = vsel %vm155, %v51, 0
  %v250 = vsel %vm155, %v52, 0
  %v253 = vsel %vm155, %v53, 0
  %v256 = vsel %vm155, %v54, 0
  %v259 = vsel %vm155, %v55, 0
  %v262 = vsel %vm155, %v56, 0
  %v265 = vsel %vm155, %v57, 0
  %v268 = vsel %vm155, %v58, 0
  %v271 = vsel %vm155, %v59, 0
  %v274 = vsel %vm155, %v60, 0
  %v277 = vsel %vm155, %v61, 0
  %v280 = vsel %vm155, %v62, 0
  %v283 = vsel %vm155, %v63, 0
  %v286 = vsel %vm155, %v64, 0
  %v289 = vsel %vm155, %v65, 0
  %v292 = vsel %vm155, %v66, 0
  %v295 = vsel %vm155, %v67, 0
  %v298 = vsel %vm155, %v68, 0
  %v301 = vsel %vm155, %v69, 0
  %v304 = vsel %vm155, %v70, 0
  %v307 = vsel %vm155, %v71, 0
  %v310 = vsel %vm155, %v72, 0
  %v313 = vsel %vm155, %v73, 0
  %v316 = vsel %vm155, %v74, 0
  %v319 = vsel %vm155, %v75, 0
  %v322 = vsel %vm155, %v76, 0
  %v325 = vsel %vm155, %v77, 0
  %v328 = vsel %vm155, %v78, 0
  %v331 = vsel %vm155, %v79, 0
  %v334 = vsel %vm155, %v80, 0
  %v337 = vsel %vm155, %v81, 0
  %v340 = vsel %vm155, %v82, 0
  %v343 = vsel %vm155, %v83, 0
  %v346 = vsel %vm155, %v84, 0
  %v349 = vsel %vm155, %v85, 0
  %v352 = vsel %vm155, %v86, 0
  %v355 = vsel %vm155, %v87, 0
  %v358 = vsel %vm155, %v88, 0
  %v361 = vsel %vm155, %v89, 0
  %v364 = vsel %vm155, %v90, 0
  %v367 = vsel %vm155, %v91, 0
  %v370 = vsel %vm155, %v92, 0
  %v373 = vsel %vm155, %v93, 0
  %v376 = vsel %vm155, %v94, 0
  %v379 = vsel %vm155, %v95, 0
  %v382 = vsel %vm155, %v96, 0
  %v385 = vsel %vm155, %v97, 0
  %v388 = vsel %vm155, %v98, 0
  %v391 = vsel %vm155, %v99, 0
  %v394 = vsel %vm155, %v100, 0
  %v397 = vsel %vm155, %v101, 0
  %v400 = vsel %vm155, %v102, 0
  %v403 = vsel %vm155, %v103, 0
  %v406 = vsel %vm155, %v104, 0
  %v409 = vsel %vm155, %v105, 0
  %v412 = vsel %vm155, %v106, 0
  %v415 = vsel %vm155, %v107, 0
  %v418 = vsel %vm155, %v108, 0
  %v421 = vsel %vm155, %v109, 0
  %v424 = vsel %vm155, %v110, 0
  %v427 = vsel %vm155, %v111, 0
  %v430 = vsel %vm155, %v112, 0
  %v433 = vsel %vm155, %v113, 0
  %v436 = vsel %vm155, %v114, 0
  %v439 = vsel %vm155, %v115, 0
  %v442 = vsel %vm155, %v116, 0
  %v445 = vsel %vm155, %v117, 0
  %v448 = vsel %vm155, %v118, 0
  %v451 = vsel %vm155, %v119, 0
  %v454 = vsel %vm155, %v120, 0
  %v457 = vsel %vm155, %v121, 0
  %v460 = vsel %vm155, %v122, 0
  %v463 = vsel %vm155, %v123, 0
  %v466 = vsel %vm155, %v124, 0
  %v469 = vsel %vm155, %v125, 0
  %v472 = vsel %vm155, %v126, 0
  %v475 = vsel %vm155, %v127, 0
  %v478 = vsel %vm155, %v128, 0
  %v481 = vsel %vm155, %v129, 0
  %v484 = vsel %vm155, %v130, 0
  %v487 = vsel %vm155, %v131, 0
  %v490 = vsel %vm155, %v132, 0
  %v493 = vsel %vm155, %v133, 0
  %v496 = vsel %vm155, %v134, 0
  %v499 = vsel %vm155, %v135, 0
  %v502 = vsel %vm155, %v136, 0
  %v505 = vsel %vm155, %v137, 0
  %v508 = vsel %vm155, %v138, 0
  %v511 = vsel %vm155, %v139, 0
  %v514 = vsel %vm155, %v140, 0
  %v517 = vsel %vm155, %v141, 0
  %v520 = vsel %vm155, %v142, 0
  %v523 = vsel %vm155, %v143, 0
  %v526 = vsel %vm155, %v144, 0
  %v529 = vsel %vm155, %v145, 0
  %531 = vmatprep.subr.mxu0 0.0
  %532 = vmatpush1.msra.mxu0 %v146
  %533 = vmatprep.subr.mxu0 0.0
  %534 = vmatpush1.msra.mxu0 %v147
  %535 = vmatprep.subr.mxu0 0.0
  %536 = vmatpush1.msra.mxu0 0.0
  %537 = vmatprep.subr.mxu0 0.0
  %538 = vmatpush1.msra.mxu0 0.0
  %539 = vmatprep.subr.mxu0 0.0
  %540 = vmatpush1.msra.mxu0 0.0
  %541 = vmatprep.subr.mxu0 0.0
  %542 = vmatpush1.msra.mxu0 0.0
  %543 = vmatprep.subr.mxu0 0.0
  %544 = vmatpush1.msra.mxu0 0.0
  %545 = vmatprep.subr.mxu0 0.0
  %546 = vmatpush1.msra.mxu0 0.0
  %547 = vmatprep.subr.mxu0 0.0
  %548 = vmatpush1.msra.mxu0 0.0
  %549 = vmatprep.subr.mxu0 0.0
  %550 = vmatpush1.msra.mxu0 0.0
  %551 = vmatprep.subr.mxu0 0.0
  %552 = vmatpush1.msra.mxu0 0.0
  %553 = vmatprep.subr.mxu0 0.0
  %554 = vmatpush1.msra.mxu0 0.0
  %555 = vmatprep.subr.mxu0 0.0
  %556 = vmatpush1.msra.mxu0 0.0
  %557 = vmatprep.subr.mxu0 0.0
  %558 = vmatpush1.msra.mxu0 0.0
  %559 = vmatprep.subr.mxu0 0.0
  %560 = vmatpush1.msra.mxu0 0.0
  %561 = vmatprep.subr.mxu0 0.0
  %562 = vmatpush1.msra.mxu0 0.0
  %563 = vmatprep.subr.mxu0 0.0
  %564 = vmatpush1.msra.mxu0 0.0
  %565 = vmatprep.subr.mxu0 0.0
  %566 = vmatpush1.msra.mxu0 0.0
  %567 = vmatprep.subr.mxu0 0.0
  %568 = vmatpush1.msra.mxu0 0.0
  %569 = vmatprep.subr.mxu0 0.0
  %570 = vmatpush1.msra.mxu0 0.0
  %571 = vmatprep.subr.mxu0 0.0
  %572 = vmatpush1.msra.mxu0 0.0
  %573 = vmatprep.subr.mxu0 0.0
  %574 = vmatpush1.msra.mxu0 0.0
  %575 = vmatprep.subr.mxu0 0.0
  %576 = vmatpush1.msra.mxu0 0.0
  %577 = vmatprep.subr.mxu0 0.0
  %578 = vmatpush1.msra.mxu0 0.0
  %579 = vmatprep.subr.mxu0 0.0
  %580 = vmatpush1.msra.mxu0 0.0
  %581 = vmatprep.subr.mxu0 0.0
  %582 = vmatpush1.msra.mxu0 0.0
  %583 = vmatprep.subr.mxu0 0.0
  %584 = vmatpush1.msra.mxu0 0.0
  %585 = vmatprep.subr.mxu0 0.0
  %586 = vmatpush1.msra.mxu0 0.0
  %587 = vmatprep.subr.mxu0 0.0
  %588 = vmatpush1.msra.mxu0 0.0
  %589 = vmatprep.subr.mxu0 0.0
  %590 = vmatpush1.msra.mxu0 0.0
  %591 = vmatprep.subr.mxu0 0.0
  %592 = vmatpush1.msra.mxu0 0.0
  %593 = vmatprep.subr.mxu0 0.0
  %594 = vmatpush1.msra.mxu0 0.0
  %595 = vmatprep.mubr.f32.mxu0 0.0
  %596 = vmatmul.mubr.f32.gmra.mrb[0].mxu0 %v157
  %v597 = vpop.f32.mrb[0].mxu0
  %v598 = vadd.f32 %v153, %v597
  %v599 = vpop.f32.mrb[0].mxu0
  %600 = vmatprep.mubr.f32.mxu0 0.0
  %601 = vmatmul.mubr.f32.gmra.mrb[0].mxu0 %v160
  %v602 = vpop.f32.mrb[0].mxu0
  %v603 = vadd.f32 %v153, %v602
  %v604 = vpop.f32.mrb[0].mxu0
  %605 = vmatprep.mubr.f32.mxu0 0.0
  %606 = vmatmul.mubr.f32.gmra.mrb[0].mxu0 %v163
  %v607 = vpop.f32.mrb[0].mxu0
  %v608 = vadd.f32 %v153, %v607
  %v609 = vpop.f32.mrb[0].mxu0
  %610 = vmatprep.mubr.f32.mxu0 0.0
  %611 = vmatmul.mubr.f32.gmra.mrb[0].mxu0 %v166
  %v612 = vpop.f32.mrb[0].mxu0
  %v613 = vadd.f32 %v153, %v612
  %v614 = vpop.f32.mrb[0].mxu0
  %615 = vmatprep.mubr.f32.mxu0 0.0
  %616 = vmatmul.mubr.f32.gmra.mrb[0].mxu0 %v169
  %v617 = vpop.f32.mrb[0].mxu0
  %v618 = vadd.f32 %v153, %v617
  %v619 = vpop.f32.mrb[0].mxu0
  %620 = vmatprep.mubr.f32.mxu0 0.0
  %621 = vmatmul.mubr.f32.gmra.mrb[0].mxu0 %v172
  %v622 = vpop.f32.mrb[0].mxu0
  %v623 = vadd.f32 %v153, %v622
  %v624 = vpop.f32.mrb[0].mxu0
  %625 = vmatprep.mubr.f32.mxu0 0.0
  %626 = vmatmul.mubr.f32.gmra.mrb[0].mxu0 %v175
  %v627 = vpop.f32.mrb[0].mxu0
  %v628 = vadd.f32 %v153, %v627
  %v629 = vpop.f32.mrb[0].mxu0
  %630 = vmatprep.mubr.f32.mxu0 0.0
  %631 = vmatmul.mubr.f32.gmra.mrb[0].mxu0 %v178
  %v632 = vpop.f32.mrb[0].mxu0
  %v633 = vadd.f32 %v153, %v632
  %v634 = vpop.f32.mrb[0].mxu0
  %635 = vmatprep.mubr.f32.mxu0 0.0
  %636 = vmatmul.mubr.f32.gmra.mrb[0].mxu0 %v181
  %v637 = vpop.f32.mrb[0].mxu0
  %v638 = vadd.f32 %v153, %v637
  %v639 = vpop.f32.mrb[0].mxu0
  %640 = vmatprep.mubr.f32.mxu0 0.0
  %641 = vmatmul.mubr.f32.gmra.mrb[0].mxu0 %v184
  %v642 = vpop.f32.mrb[0].mxu0
  %v643 = vadd.f32 %v153, %v642
  %v644 = vpop.f32.mrb[0].mxu0
  %645 = vmatprep.mubr.f32.mxu0 0.0
  %646 = vmatmul.mubr.f32.gmra.mrb[0].mxu0 %v187
  %v647 = vpop.f32.mrb[0].mxu0
  %v648 = vadd.f32 %v153, %v647
  %v649 = vpop.f32.mrb[0].mxu0
  %650 = vmatprep.mubr.f32.mxu0 0.0
  %651 = vmatmul.mubr.f32.gmra.mrb[0].mxu0 %v190
  %v652 = vpop.f32.mrb[0].mxu0
  %v653 = vadd.f32 %v153, %v652
  %v654 = vpop.f32.mrb[0].mxu0
  %655 = vmatprep.mubr.f32.mxu0 0.0
  %656 = vmatmul.mubr.f32.gmra.mrb[0].mxu0 %v193
  %v657 = vpop.f32.mrb[0].mxu0
  %v658 = vadd.f32 %v153, %v657
  %v659 = vpop.f32.mrb[0].mxu0
  %660 = vmatprep.mubr.f32.mxu0 0.0
  %661 = vmatmul.mubr.f32.gmra.mrb[0].mxu0 %v196
  %v662 = vpop.f32.mrb[0].mxu0
  %v663 = vadd.f32 %v153, %v662
  %v664 = vpop.f32.mrb[0].mxu0
  %665 = vmatprep.mubr.f32.mxu0 0.0
  %666 = vmatmul.mubr.f32.gmra.mrb[0].mxu0 %v199
  %v667 = vpop.f32.mrb[0].mxu0
  %v668 = vadd.f32 %v153, %v667
  %v669 = vpop.f32.mrb[0].mxu0
  %670 = vmatprep.mubr.f32.mxu0 0.0
  %671 = vmatmul.mubr.f32.gmra.mrb[0].mxu0 %v202
  %v672 = vpop.f32.mrb[0].mxu0
  %v673 = vadd.f32 %v153, %v672
  %v674 = vpop.f32.mrb[0].mxu0
  %675 = vmatprep.mubr.f32.mxu0 0.0
  %676 = vmatmul.mubr.f32.gmra.mrb[0].mxu0 %v205
  %v677 = vpop.f32.mrb[0].mxu0
  %v678 = vadd.f32 %v153, %v677
  %v679 = vpop.f32.mrb[0].mxu0
  %680 = vmatprep.mubr.f32.mxu0 0.0
  %681 = vmatmul.mubr.f32.gmra.mrb[0].mxu0 %v208
  %v682 = vpop.f32.mrb[0].mxu0
  %v683 = vadd.f32 %v153, %v682
  %v684 = vpop.f32.mrb[0].mxu0
  %685 = vmatprep.mubr.f32.mxu0 0.0
  %686 = vmatmul.mubr.f32.gmra.mrb[0].mxu0 %v211
  %v687 = vpop.f32.mrb[0].mxu0
  %v688 = vadd.f32 %v153, %v687
  %v689 = vpop.f32.mrb[0].mxu0
  %690 = vmatprep.mubr.f32.mxu0 0.0
  %691 = vmatmul.mubr.f32.gmra.mrb[0].mxu0 %v214
  %v692 = vpop.f32.mrb[0].mxu0
  %v693 = vadd.f32 %v153, %v692
  %v694 = vpop.f32.mrb[0].mxu0
  %695 = vmatprep.mubr.f32.mxu0 0.0
  %696 = vmatmul.mubr.f32.gmra.mrb[0].mxu0 %v217
  %v697 = vpop.f32.mrb[0].mxu0
  %v698 = vadd.f32 %v153, %v697
  %v699 = vpop.f32.mrb[0].mxu0
  %700 = vmatprep.mubr.f32.mxu0 0.0
  %701 = vmatmul.mubr.f32.gmra.mrb[0].mxu0 %v220
  %v702 = vpop.f32.mrb[0].mxu0
  %v703 = vadd.f32 %v153, %v702
  %v704 = vpop.f32.mrb[0].mxu0
  %705 = vmatprep.mubr.f32.mxu0 0.0
  %706 = vmatmul.mubr.f32.gmra.mrb[0].mxu0 %v223
  %v707 = vpop.f32.mrb[0].mxu0
  %v708 = vadd.f32 %v153, %v707
  %v709 = vpop.f32.mrb[0].mxu0
  %710 = vmatprep.mubr.f32.mxu0 0.0
  %711 = vmatmul.mubr.f32.gmra.mrb[0].mxu0 %v226
  %v712 = vpop.f32.mrb[0].mxu0
  %v713 = vadd.f32 %v153, %v712
  %v714 = vpop.f32.mrb[0].mxu0
  %715 = vmatprep.mubr.f32.mxu0 0.0
  %716 = vmatmul.mubr.f32.gmra.mrb[0].mxu0 %v229
  %v717 = vpop.f32.mrb[0].mxu0
  %v718 = vadd.f32 %v153, %v717
  %v719 = vpop.f32.mrb[0].mxu0
  %720 = vmatprep.mubr.f32.mxu0 0.0
  %721 = vmatmul.mubr.f32.gmra.mrb[0].mxu0 %v232
  %v722 = vpop.f32.mrb[0].mxu0
  %v723 = vadd.f32 %v153, %v722
  %v724 = vpop.f32.mrb[0].mxu0
  %725 = vmatprep.mubr.f32.mxu0 0.0
  %726 = vmatmul.mubr.f32.gmra.mrb[0].mxu0 %v235
  %v727 = vpop.f32.mrb[0].mxu0
  %v728 = vadd.f32 %v153, %v727
  %v729 = vpop.f32.mrb[0].mxu0
  %730 = vmatprep.mubr.f32.mxu0 0.0
  %731 = vmatmul.mubr.f32.gmra.mrb[0].mxu0 %v238
  %v732 = vpop.f32.mrb[0].mxu0
  %v733 = vadd.f32 %v153, %v732
  %v734 = vpop.f32.mrb[0].mxu0
  %735 = vmatprep.mubr.f32.mxu0 0.0
  %736 = vmatmul.mubr.f32.gmra.mrb[0].mxu0 %v241
  %v737 = vpop.f32.mrb[0].mxu0
  %v738 = vadd.f32 %v153, %v737
  %v739 = vpop.f32.mrb[0].mxu0
  %740 = vmatprep.mubr.f32.mxu0 0.0
  %741 = vmatmul.mubr.f32.gmra.mrb[0].mxu0 %v244
  %v742 = vpop.f32.mrb[0].mxu0
  %v743 = vadd.f32 %v153, %v742
  %v744 = vpop.f32.mrb[0].mxu0
  %745 = vmatprep.mubr.f32.mxu0 0.0
  %746 = vmatmul.mubr.f32.gmra.mrb[0].mxu0 %v247
  %v747 = vpop.f32.mrb[0].mxu0
  %v748 = vadd.f32 %v153, %v747
  %v749 = vpop.f32.mrb[0].mxu0
  %750 = vmatprep.mubr.f32.mxu0 0.0
  %751 = vmatmul.mubr.f32.gmra.mrb[0].mxu0 %v250
  %v752 = vpop.f32.mrb[0].mxu0
  %v753 = vadd.f32 %v153, %v752
  %v754 = vpop.f32.mrb[0].mxu0
  %755 = vmatprep.mubr.f32.mxu0 0.0
  %756 = vmatmul.mubr.f32.gmra.mrb[0].mxu0 %v253
  %v757 = vpop.f32.mrb[0].mxu0
  %v758 = vadd.f32 %v153, %v757
  %v759 = vpop.f32.mrb[0].mxu0
  %760 = vmatprep.mubr.f32.mxu0 0.0
  %761 = vmatmul.mubr.f32.gmra.mrb[0].mxu0 %v256
  %v762 = vpop.f32.mrb[0].mxu0
  %v763 = vadd.f32 %v153, %v762
  %v764 = vpop.f32.mrb[0].mxu0
  %765 = vmatprep.mubr.f32.mxu0 0.0
  %766 = vmatmul.mubr.f32.gmra.mrb[0].mxu0 %v259
  %v767 = vpop.f32.mrb[0].mxu0
  %v768 = vadd.f32 %v153, %v767
  %v769 = vpop.f32.mrb[0].mxu0
  %770 = vmatprep.mubr.f32.mxu0 0.0
  %771 = vmatmul.mubr.f32.gmra.mrb[0].mxu0 %v262
  %v772 = vpop.f32.mrb[0].mxu0
  %v773 = vadd.f32 %v153, %v772
  %v774 = vpop.f32.mrb[0].mxu0
  %775 = vmatprep.mubr.f32.mxu0 0.0
  %776 = vmatmul.mubr.f32.gmra.mrb[0].mxu0 %v265
  %v777 = vpop.f32.mrb[0].mxu0
  %v778 = vadd.f32 %v153, %v777
  %v779 = vpop.f32.mrb[0].mxu0
  %780 = vmatprep.mubr.f32.mxu0 0.0
  %781 = vmatmul.mubr.f32.gmra.mrb[0].mxu0 %v268
  %v782 = vpop.f32.mrb[0].mxu0
  %v783 = vadd.f32 %v153, %v782
  %v784 = vpop.f32.mrb[0].mxu0
  %785 = vmatprep.mubr.f32.mxu0 0.0
  %786 = vmatmul.mubr.f32.gmra.mrb[0].mxu0 %v271
  %v787 = vpop.f32.mrb[0].mxu0
  %v788 = vadd.f32 %v153, %v787
  %v789 = vpop.f32.mrb[0].mxu0
  %790 = vmatprep.mubr.f32.mxu0 0.0
  %791 = vmatmul.mubr.f32.gmra.mrb[0].mxu0 %v274
  %v792 = vpop.f32.mrb[0].mxu0
  %v793 = vadd.f32 %v153, %v792
  %v794 = vpop.f32.mrb[0].mxu0
  %795 = vmatprep.mubr.f32.mxu0 0.0
  %796 = vmatmul.mubr.f32.gmra.mrb[0].mxu0 %v277
  %v797 = vpop.f32.mrb[0].mxu0
  %v798 = vadd.f32 %v153, %v797
  %v799 = vpop.f32.mrb[0].mxu0
  %800 = vmatprep.mubr.f32.mxu0 0.0
  %801 = vmatmul.mubr.f32.gmra.mrb[0].mxu0 %v280
  %v802 = vpop.f32.mrb[0].mxu0
  %v803 = vadd.f32 %v153, %v802
  %v804 = vpop.f32.mrb[0].mxu0
  %805 = vmatprep.mubr.f32.mxu0 0.0
  %806 = vmatmul.mubr.f32.gmra.mrb[0].mxu0 %v283
  %v807 = vpop.f32.mrb[0].mxu0
  %v808 = vadd.f32 %v153, %v807
  %v809 = vpop.f32.mrb[0].mxu0
  %810 = vmatprep.mubr.f32.mxu0 0.0
  %811 = vmatmul.mubr.f32.gmra.mrb[0].mxu0 %v286
  %v812 = vpop.f32.mrb[0].mxu0
  %v813 = vadd.f32 %v153, %v812
  %v814 = vpop.f32.mrb[0].mxu0
  %815 = vmatprep.mubr.f32.mxu0 0.0
  %816 = vmatmul.mubr.f32.gmra.mrb[0].mxu0 %v289
  %v817 = vpop.f32.mrb[0].mxu0
  %v818 = vadd.f32 %v153, %v817
  %v819 = vpop.f32.mrb[0].mxu0
  %820 = vmatprep.mubr.f32.mxu0 0.0
  %821 = vmatmul.mubr.f32.gmra.mrb[0].mxu0 %v292
  %v822 = vpop.f32.mrb[0].mxu0
  %v823 = vadd.f32 %v153, %v822
  %v824 = vpop.f32.mrb[0].mxu0
  %825 = vmatprep.mubr.f32.mxu0 0.0
  %826 = vmatmul.mubr.f32.gmra.mrb[0].mxu0 %v295
  %v827 = vpop.f32.mrb[0].mxu0
  %v828 = vadd.f32 %v153, %v827
  %v829 = vpop.f32.mrb[0].mxu0
  %830 = vmatprep.mubr.f32.mxu0 0.0
  %831 = vmatmul.mubr.f32.gmra.mrb[0].mxu0 %v298
  %v832 = vpop.f32.mrb[0].mxu0
  %v833 = vadd.f32 %v153, %v832
  %v834 = vpop.f32.mrb[0].mxu0
  %835 = vmatprep.mubr.f32.mxu0 0.0
  %836 = vmatmul.mubr.f32.gmra.mrb[0].mxu0 %v301
  %v837 = vpop.f32.mrb[0].mxu0
  %v838 = vadd.f32 %v153, %v837
  %v839 = vpop.f32.mrb[0].mxu0
  %840 = vmatprep.mubr.f32.mxu0 0.0
  %841 = vmatmul.mubr.f32.gmra.mrb[0].mxu0 %v304
  %v842 = vpop.f32.mrb[0].mxu0
  %v843 = vadd.f32 %v153, %v842
  %v844 = vpop.f32.mrb[0].mxu0
  %845 = vmatprep.mubr.f32.mxu0 0.0
  %846 = vmatmul.mubr.f32.gmra.mrb[0].mxu0 %v307
  %v847 = vpop.f32.mrb[0].mxu0
  %v848 = vadd.f32 %v153, %v847
  %v849 = vpop.f32.mrb[0].mxu0
  %850 = vmatprep.mubr.f32.mxu0 0.0
  %851 = vmatmul.mubr.f32.gmra.mrb[0].mxu0 %v310
  %v852 = vpop.f32.mrb[0].mxu0
  %v853 = vadd.f32 %v153, %v852
  %v854 = vpop.f32.mrb[0].mxu0
  %855 = vmatprep.mubr.f32.mxu0 0.0
  %856 = vmatmul.mubr.f32.gmra.mrb[0].mxu0 %v313
  %v857 = vpop.f32.mrb[0].mxu0
  %v858 = vadd.f32 %v153, %v857
  %v859 = vpop.f32.mrb[0].mxu0
  %860 = vmatprep.mubr.f32.mxu0 0.0
  %861 = vmatmul.mubr.f32.gmra.mrb[0].mxu0 %v316
  %v862 = vpop.f32.mrb[0].mxu0
  %v863 = vadd.f32 %v153, %v862
  %v864 = vpop.f32.mrb[0].mxu0
  %865 = vmatprep.mubr.f32.mxu0 0.0
  %866 = vmatmul.mubr.f32.gmra.mrb[0].mxu0 %v319
  %v867 = vpop.f32.mrb[0].mxu0
  %v868 = vadd.f32 %v153, %v867
  %v869 = vpop.f32.mrb[0].mxu0
  %870 = vmatprep.mubr.f32.mxu0 0.0
  %871 = vmatmul.mubr.f32.gmra.mrb[0].mxu0 %v322
  %v872 = vpop.f32.mrb[0].mxu0
  %v873 = vadd.f32 %v153, %v872
  %v874 = vpop.f32.mrb[0].mxu0
  %875 = vmatprep.mubr.f32.mxu0 0.0
  %876 = vmatmul.mubr.f32.gmra.mrb[0].mxu0 %v325
  %v877 = vpop.f32.mrb[0].mxu0
  %v878 = vadd.f32 %v153, %v877
  %v879 = vpop.f32.mrb[0].mxu0
  %880 = vmatprep.mubr.f32.mxu0 0.0
  %881 = vmatmul.mubr.f32.gmra.mrb[0].mxu0 %v328
  %v882 = vpop.f32.mrb[0].mxu0
  %v883 = vadd.f32 %v153, %v882
  %v884 = vpop.f32.mrb[0].mxu0
  %885 = vmatprep.mubr.f32.mxu0 0.0
  %886 = vmatmul.mubr.f32.gmra.mrb[0].mxu0 %v331
  %v887 = vpop.f32.mrb[0].mxu0
  %v888 = vadd.f32 %v153, %v887
  %v889 = vpop.f32.mrb[0].mxu0
  %890 = vmatprep.mubr.f32.mxu0 0.0
  %891 = vmatmul.mubr.f32.gmra.mrb[0].mxu0 %v334
  %v892 = vpop.f32.mrb[0].mxu0
  %v893 = vadd.f32 %v153, %v892
  %v894 = vpop.f32.mrb[0].mxu0
  %895 = vmatprep.mubr.f32.mxu0 0.0
  %896 = vmatmul.mubr.f32.gmra.mrb[0].mxu0 %v337
  %v897 = vpop.f32.mrb[0].mxu0
  %v898 = vadd.f32 %v153, %v897
  %v899 = vpop.f32.mrb[0].mxu0
  %900 = vmatprep.mubr.f32.mxu0 0.0
  %901 = vmatmul.mubr.f32.gmra.mrb[0].mxu0 %v340
  %v902 = vpop.f32.mrb[0].mxu0
  %v903 = vadd.f32 %v153, %v902
  %v904 = vpop.f32.mrb[0].mxu0
  %905 = vmatprep.mubr.f32.mxu0 0.0
  %906 = vmatmul.mubr.f32.gmra.mrb[0].mxu0 %v343
  %v907 = vpop.f32.mrb[0].mxu0
  %v908 = vadd.f32 %v153, %v907
  %v909 = vpop.f32.mrb[0].mxu0
  %910 = vmatprep.mubr.f32.mxu0 0.0
  %911 = vmatmul.mubr.f32.gmra.mrb[0].mxu0 %v346
  %v912 = vpop.f32.mrb[0].mxu0
  %v913 = vadd.f32 %v153, %v912
  %v914 = vpop.f32.mrb[0].mxu0
  %915 = vmatprep.mubr.f32.mxu0 0.0
  %916 = vmatmul.mubr.f32.gmra.mrb[0].mxu0 %v349
  %v917 = vpop.f32.mrb[0].mxu0
  %v918 = vadd.f32 %v153, %v917
  %v919 = vpop.f32.mrb[0].mxu0
  %920 = vmatprep.mubr.f32.mxu0 0.0
  %921 = vmatmul.mubr.f32.gmra.mrb[0].mxu0 %v352
  %v922 = vpop.f32.mrb[0].mxu0
  %v923 = vadd.f32 %v153, %v922
  %v924 = vpop.f32.mrb[0].mxu0
  %925 = vmatprep.mubr.f32.mxu0 0.0
  %926 = vmatmul.mubr.f32.gmra.mrb[0].mxu0 %v355
  %v927 = vpop.f32.mrb[0].mxu0
  %v928 = vadd.f32 %v153, %v927
  %v929 = vpop.f32.mrb[0].mxu0
  %930 = vmatprep.mubr.f32.mxu0 0.0
  %931 = vmatmul.mubr.f32.gmra.mrb[0].mxu0 %v358
  %v932 = vpop.f32.mrb[0].mxu0
  %v933 = vadd.f32 %v153, %v932
  %v934 = vpop.f32.mrb[0].mxu0
  %935 = vmatprep.mubr.f32.mxu0 0.0
  %936 = vmatmul.mubr.f32.gmra.mrb[0].mxu0 %v361
  %v937 = vpop.f32.mrb[0].mxu0
  %v938 = vadd.f32 %v153, %v937
  %v939 = vpop.f32.mrb[0].mxu0
  %940 = vmatprep.mubr.f32.mxu0 0.0
  %941 = vmatmul.mubr.f32.gmra.mrb[0].mxu0 %v364
  %v942 = vpop.f32.mrb[0].mxu0
  %v943 = vadd.f32 %v153, %v942
  %v944 = vpop.f32.mrb[0].mxu0
  %945 = vmatprep.mubr.f32.mxu0 0.0
  %946 = vmatmul.mubr.f32.gmra.mrb[0].mxu0 %v367
  %v947 = vpop.f32.mrb[0].mxu0
  %v948 = vadd.f32 %v153, %v947
  %v949 = vpop.f32.mrb[0].mxu0
  %950 = vmatprep.mubr.f32.mxu0 0.0
  %951 = vmatmul.mubr.f32.gmra.mrb[0].mxu0 %v370
  %v952 = vpop.f32.mrb[0].mxu0
  %v953 = vadd.f32 %v153, %v952
  %v954 = vpop.f32.mrb[0].mxu0
  %955 = vmatprep.mubr.f32.mxu0 0.0
  %956 = vmatmul.mubr.f32.gmra.mrb[0].mxu0 %v373
  %v957 = vpop.f32.mrb[0].mxu0
  %v958 = vadd.f32 %v153, %v957
  %v959 = vpop.f32.mrb[0].mxu0
  %960 = vmatprep.mubr.f32.mxu0 0.0
  %961 = vmatmul.mubr.f32.gmra.mrb[0].mxu0 %v376
  %v962 = vpop.f32.mrb[0].mxu0
  %v963 = vadd.f32 %v153, %v962
  %v964 = vpop.f32.mrb[0].mxu0
  %965 = vmatprep.mubr.f32.mxu0 0.0
  %966 = vmatmul.mubr.f32.gmra.mrb[0].mxu0 %v379
  %v967 = vpop.f32.mrb[0].mxu0
  %v968 = vadd.f32 %v153, %v967
  %v969 = vpop.f32.mrb[0].mxu0
  %970 = vmatprep.mubr.f32.mxu0 0.0
  %971 = vmatmul.mubr.f32.gmra.mrb[0].mxu0 %v382
  %v972 = vpop.f32.mrb[0].mxu0
  %v973 = vadd.f32 %v153, %v972
  %v974 = vpop.f32.mrb[0].mxu0
  %975 = vmatprep.mubr.f32.mxu0 0.0
  %976 = vmatmul.mubr.f32.gmra.mrb[0].mxu0 %v385
  %v977 = vpop.f32.mrb[0].mxu0
  %v978 = vadd.f32 %v153, %v977
  %v979 = vpop.f32.mrb[0].mxu0
  %980 = vmatprep.mubr.f32.mxu0 0.0
  %981 = vmatmul.mubr.f32.gmra.mrb[0].mxu0 %v388
  %v982 = vpop.f32.mrb[0].mxu0
  %v983 = vadd.f32 %v153, %v982
  %v984 = vpop.f32.mrb[0].mxu0
  %985 = vmatprep.mubr.f32.mxu0 0.0
  %986 = vmatmul.mubr.f32.gmra.mrb[0].mxu0 %v391
  %v987 = vpop.f32.mrb[0].mxu0
  %v988 = vadd.f32 %v153, %v987
  %v989 = vpop.f32.mrb[0].mxu0
  %990 = vmatprep.mubr.f32.mxu0 0.0
  %991 = vmatmul.mubr.f32.gmra.mrb[0].mxu0 %v394
  %v992 = vpop.f32.mrb[0].mxu0
  %v993 = vadd.f32 %v153, %v992
  %v994 = vpop.f32.mrb[0].mxu0
  %995 = vmatprep.mubr.f32.mxu0 0.0
  %996 = vmatmul.mubr.f32.gmra.mrb[0].mxu0 %v397
  %v997 = vpop.f32.mrb[0].mxu0
  %v998 = vadd.f32 %v153, %v997
  %v999 = vpop.f32.mrb[0].mxu0
  %1000 = vmatprep.mubr.f32.mxu0 0.0
  %1001 = vmatmul.mubr.f32.gmra.mrb[0].mxu0 %v400
  %v1002 = vpop.f32.mrb[0].mxu0
  %v1003 = vadd.f32 %v153, %v1002
  %v1004 = vpop.f32.mrb[0].mxu0
  %1005 = vmatprep.mubr.f32.mxu0 0.0
  %1006 = vmatmul.mubr.f32.gmra.mrb[0].mxu0 %v403
  %v1007 = vpop.f32.mrb[0].mxu0
  %v1008 = vadd.f32 %v153, %v1007
  %v1009 = vpop.f32.mrb[0].mxu0
  %1010 = vmatprep.mubr.f32.mxu0 0.0
  %1011 = vmatmul.mubr.f32.gmra.mrb[0].mxu0 %v406
  %v1012 = vpop.f32.mrb[0].mxu0
  %v1013 = vadd.f32 %v153, %v1012
  %v1014 = vpop.f32.mrb[0].mxu0
  %1015 = vmatprep.mubr.f32.mxu0 0.0
  %1016 = vmatmul.mubr.f32.gmra.mrb[0].mxu0 %v409
  %v1017 = vpop.f32.mrb[0].mxu0
  %v1018 = vadd.f32 %v153, %v1017
  %v1019 = vpop.f32.mrb[0].mxu0
  %1020 = vmatprep.mubr.f32.mxu0 0.0
  %1021 = vmatmul.mubr.f32.gmra.mrb[0].mxu0 %v412
  %v1022 = vpop.f32.mrb[0].mxu0
  %v1023 = vadd.f32 %v153, %v1022
  %v1024 = vpop.f32.mrb[0].mxu0
  %1025 = vmatprep.mubr.f32.mxu0 0.0
  %1026 = vmatmul.mubr.f32.gmra.mrb[0].mxu0 %v415
  %v1027 = vpop.f32.mrb[0].mxu0
  %v1028 = vadd.f32 %v153, %v1027
  %v1029 = vpop.f32.mrb[0].mxu0
  %1030 = vmatprep.mubr.f32.mxu0 0.0
  %1031 = vmatmul.mubr.f32.gmra.mrb[0].mxu0 %v418
  %v1032 = vpop.f32.mrb[0].mxu0
  %v1033 = vadd.f32 %v153, %v1032
  %v1034 = vpop.f32.mrb[0].mxu0
  %1035 = vmatprep.mubr.f32.mxu0 0.0
  %1036 = vmatmul.mubr.f32.gmra.mrb[0].mxu0 %v421
  %v1037 = vpop.f32.mrb[0].mxu0
  %v1038 = vadd.f32 %v153, %v1037
  %v1039 = vpop.f32.mrb[0].mxu0
  %1040 = vmatprep.mubr.f32.mxu0 0.0
  %1041 = vmatmul.mubr.f32.gmra.mrb[0].mxu0 %v424
  %v1042 = vpop.f32.mrb[0].mxu0
  %v1043 = vadd.f32 %v153, %v1042
  %v1044 = vpop.f32.mrb[0].mxu0
  %1045 = vmatprep.mubr.f32.mxu0 0.0
  %1046 = vmatmul.mubr.f32.gmra.mrb[0].mxu0 %v427
  %v1047 = vpop.f32.mrb[0].mxu0
  %v1048 = vadd.f32 %v153, %v1047
  %v1049 = vpop.f32.mrb[0].mxu0
  %1050 = vmatprep.mubr.f32.mxu0 0.0
  %1051 = vmatmul.mubr.f32.gmra.mrb[0].mxu0 %v430
  %v1052 = vpop.f32.mrb[0].mxu0
  %v1053 = vadd.f32 %v153, %v1052
  %v1054 = vpop.f32.mrb[0].mxu0
  %1055 = vmatprep.mubr.f32.mxu0 0.0
  %1056 = vmatmul.mubr.f32.gmra.mrb[0].mxu0 %v433
  %v1057 = vpop.f32.mrb[0].mxu0
  %v1058 = vadd.f32 %v153, %v1057
  %v1059 = vpop.f32.mrb[0].mxu0
  %1060 = vmatprep.mubr.f32.mxu0 0.0
  %1061 = vmatmul.mubr.f32.gmra.mrb[0].mxu0 %v436
  %v1062 = vpop.f32.mrb[0].mxu0
  %v1063 = vadd.f32 %v153, %v1062
  %v1064 = vpop.f32.mrb[0].mxu0
  %1065 = vmatprep.mubr.f32.mxu0 0.0
  %1066 = vmatmul.mubr.f32.gmra.mrb[0].mxu0 %v439
  %v1067 = vpop.f32.mrb[0].mxu0
  %v1068 = vadd.f32 %v153, %v1067
  %v1069 = vpop.f32.mrb[0].mxu0
  %1070 = vmatprep.mubr.f32.mxu0 0.0
  %1071 = vmatmul.mubr.f32.gmra.mrb[0].mxu0 %v442
  %v1072 = vpop.f32.mrb[0].mxu0
  %v1073 = vadd.f32 %v153, %v1072
  %v1074 = vpop.f32.mrb[0].mxu0
  %1075 = vmatprep.mubr.f32.mxu0 0.0
  %1076 = vmatmul.mubr.f32.gmra.mrb[0].mxu0 %v445
  %v1077 = vpop.f32.mrb[0].mxu0
  %v1078 = vadd.f32 %v153, %v1077
  %v1079 = vpop.f32.mrb[0].mxu0
  %1080 = vmatprep.mubr.f32.mxu0 0.0
  %1081 = vmatmul.mubr.f32.gmra.mrb[0].mxu0 %v448
  %v1082 = vpop.f32.mrb[0].mxu0
  %v1083 = vadd.f32 %v153, %v1082
  %v1084 = vpop.f32.mrb[0].mxu0
  %1085 = vmatprep.mubr.f32.mxu0 0.0
  %1086 = vmatmul.mubr.f32.gmra.mrb[0].mxu0 %v451
  %v1087 = vpop.f32.mrb[0].mxu0
  %v1088 = vadd.f32 %v153, %v1087
  %v1089 = vpop.f32.mrb[0].mxu0
  %1090 = vmatprep.mubr.f32.mxu0 0.0
  %1091 = vmatmul.mubr.f32.gmra.mrb[0].mxu0 %v454
  %v1092 = vpop.f32.mrb[0].mxu0
  %v1093 = vadd.f32 %v153, %v1092
  %v1094 = vpop.f32.mrb[0].mxu0
  %1095 = vmatprep.mubr.f32.mxu0 0.0
  %1096 = vmatmul.mubr.f32.gmra.mrb[0].mxu0 %v457
  %v1097 = vpop.f32.mrb[0].mxu0
  %v1098 = vadd.f32 %v153, %v1097
  %v1099 = vpop.f32.mrb[0].mxu0
  %1100 = vmatprep.mubr.f32.mxu0 0.0
  %1101 = vmatmul.mubr.f32.gmra.mrb[0].mxu0 %v460
  %v1102 = vpop.f32.mrb[0].mxu0
  %v1103 = vadd.f32 %v153, %v1102
  %v1104 = vpop.f32.mrb[0].mxu0
  %1105 = vmatprep.mubr.f32.mxu0 0.0
  %1106 = vmatmul.mubr.f32.gmra.mrb[0].mxu0 %v463
  %v1107 = vpop.f32.mrb[0].mxu0
  %v1108 = vadd.f32 %v153, %v1107
  %v1109 = vpop.f32.mrb[0].mxu0
  %1110 = vmatprep.mubr.f32.mxu0 0.0
  %1111 = vmatmul.mubr.f32.gmra.mrb[0].mxu0 %v466
  %v1112 = vpop.f32.mrb[0].mxu0
  %v1113 = vadd.f32 %v153, %v1112
  %v1114 = vpop.f32.mrb[0].mxu0
  %1115 = vmatprep.mubr.f32.mxu0 0.0
  %1116 = vmatmul.mubr.f32.gmra.mrb[0].mxu0 %v469
  %v1117 = vpop.f32.mrb[0].mxu0
  %v1118 = vadd.f32 %v153, %v1117
  %v1119 = vpop.f32.mrb[0].mxu0
  %1120 = vmatprep.mubr.f32.mxu0 0.0
  %1121 = vmatmul.mubr.f32.gmra.mrb[0].mxu0 %v472
  %v1122 = vpop.f32.mrb[0].mxu0
  %v1123 = vadd.f32 %v153, %v1122
  %v1124 = vpop.f32.mrb[0].mxu0
  %1125 = vmatprep.mubr.f32.mxu0 0.0
  %1126 = vmatmul.mubr.f32.gmra.mrb[0].mxu0 %v475
  %v1127 = vpop.f32.mrb[0].mxu0
  %v1128 = vadd.f32 %v153, %v1127
  %v1129 = vpop.f32.mrb[0].mxu0
  %1130 = vmatprep.mubr.f32.mxu0 0.0
  %1131 = vmatmul.mubr.f32.gmra.mrb[0].mxu0 %v478
  %v1132 = vpop.f32.mrb[0].mxu0
  %v1133 = vadd.f32 %v153, %v1132
  %v1134 = vpop.f32.mrb[0].mxu0
  %1135 = vmatprep.mubr.f32.mxu0 0.0
  %1136 = vmatmul.mubr.f32.gmra.mrb[0].mxu0 %v481
  %v1137 = vpop.f32.mrb[0].mxu0
  %v1138 = vadd.f32 %v153, %v1137
  %v1139 = vpop.f32.mrb[0].mxu0
  %1140 = vmatprep.mubr.f32.mxu0 0.0
  %1141 = vmatmul.mubr.f32.gmra.mrb[0].mxu0 %v484
  %v1142 = vpop.f32.mrb[0].mxu0
  %v1143 = vadd.f32 %v153, %v1142
  %v1144 = vpop.f32.mrb[0].mxu0
  %1145 = vmatprep.mubr.f32.mxu0 0.0
  %1146 = vmatmul.mubr.f32.gmra.mrb[0].mxu0 %v487
  %v1147 = vpop.f32.mrb[0].mxu0
  %v1148 = vadd.f32 %v153, %v1147
  %v1149 = vpop.f32.mrb[0].mxu0
  %1150 = vmatprep.mubr.f32.mxu0 0.0
  %1151 = vmatmul.mubr.f32.gmra.mrb[0].mxu0 %v490
  %v1152 = vpop.f32.mrb[0].mxu0
  %v1153 = vadd.f32 %v153, %v1152
  %v1154 = vpop.f32.mrb[0].mxu0
  %1155 = vmatprep.mubr.f32.mxu0 0.0
  %1156 = vmatmul.mubr.f32.gmra.mrb[0].mxu0 %v493
  %v1157 = vpop.f32.mrb[0].mxu0
  %v1158 = vadd.f32 %v153, %v1157
  %v1159 = vpop.f32.mrb[0].mxu0
  %1160 = vmatprep.mubr.f32.mxu0 0.0
  %1161 = vmatmul.mubr.f32.gmra.mrb[0].mxu0 %v496
  %v1162 = vpop.f32.mrb[0].mxu0
  %v1163 = vadd.f32 %v153, %v1162
  %v1164 = vpop.f32.mrb[0].mxu0
  %1165 = vmatprep.mubr.f32.mxu0 0.0
  %1166 = vmatmul.mubr.f32.gmra.mrb[0].mxu0 %v499
  %v1167 = vpop.f32.mrb[0].mxu0
  %v1168 = vadd.f32 %v153, %v1167
  %v1169 = vpop.f32.mrb[0].mxu0
  %1170 = vmatprep.mubr.f32.mxu0 0.0
  %1171 = vmatmul.mubr.f32.gmra.mrb[0].mxu0 %v502
  %v1172 = vpop.f32.mrb[0].mxu0
  %v1173 = vadd.f32 %v153, %v1172
  %v1174 = vpop.f32.mrb[0].mxu0
  %1175 = vmatprep.mubr.f32.mxu0 0.0
  %1176 = vmatmul.mubr.f32.gmra.mrb[0].mxu0 %v505
  %v1177 = vpop.f32.mrb[0].mxu0
  %v1178 = vadd.f32 %v153, %v1177
  %v1179 = vpop.f32.mrb[0].mxu0
  %1180 = vmatprep.mubr.f32.mxu0 0.0
  %1181 = vmatmul.mubr.f32.gmra.mrb[0].mxu0 %v508
  %v1182 = vpop.f32.mrb[0].mxu0
  %v1183 = vadd.f32 %v153, %v1182
  %v1184 = vpop.f32.mrb[0].mxu0
  %1185 = vmatprep.mubr.f32.mxu0 0.0
  %1186 = vmatmul.mubr.f32.gmra.mrb[0].mxu0 %v511
  %v1187 = vpop.f32.mrb[0].mxu0
  %v1188 = vadd.f32 %v153, %v1187
  %v1189 = vpop.f32.mrb[0].mxu0
  %1190 = vmatprep.mubr.f32.mxu0 0.0
  %1191 = vmatmul.mubr.f32.gmra.mrb[0].mxu0 %v514
  %v1192 = vpop.f32.mrb[0].mxu0
  %v1193 = vadd.f32 %v153, %v1192
  %v1194 = vpop.f32.mrb[0].mxu0
  %1195 = vmatprep.mubr.f32.mxu0 0.0
  %1196 = vmatmul.mubr.f32.gmra.mrb[0].mxu0 %v517
  %v1197 = vpop.f32.mrb[0].mxu0
  %v1198 = vadd.f32 %v153, %v1197
  %v1199 = vpop.f32.mrb[0].mxu0
  %1200 = vmatprep.mubr.f32.mxu0 0.0
  %1201 = vmatmul.mubr.f32.gmra.mrb[0].mxu0 %v520
  %v1202 = vpop.f32.mrb[0].mxu0
  %v1203 = vadd.f32 %v153, %v1202
  %v1204 = vpop.f32.mrb[0].mxu0
  %1205 = vmatprep.mubr.f32.mxu0 0.0
  %1206 = vmatmul.mubr.f32.gmra.mrb[0].mxu0 %v523
  %v1207 = vpop.f32.mrb[0].mxu0
  %v1208 = vadd.f32 %v153, %v1207
  %v1209 = vpop.f32.mrb[0].mxu0
  %1210 = vmatprep.mubr.f32.mxu0 0.0
  %1211 = vmatmul.mubr.f32.gmra.mrb[0].mxu0 %v526
  %v1212 = vpop.f32.mrb[0].mxu0
  %v1213 = vadd.f32 %v153, %v1212
  %v1214 = vpop.f32.mrb[0].mxu0
  %1215 = vmatprep.mubr.f32.mxu0 0.0
  %1216 = vmatmul.mubr.f32.gmra.mrb[0].mxu0 %v529
  %v1217 = vpop.f32.mrb[0].mxu0
  %v1218 = vadd.f32 %v153, %v1217
  %v1219 = vpop.f32.mrb[0].mxu0
  %1220 = vdwg.mxu0
  %v1221 = vmax.f32 %v598, 0.0
  %v1222 = vmax.f32 %v603, 0.0
  %v1223 = vmax.f32 %v608, 0.0
  %v1224 = vmax.f32 %v613, 0.0
  %v1225 = vmax.f32 %v618, 0.0
  %v1226 = vmax.f32 %v623, 0.0
  %v1227 = vmax.f32 %v628, 0.0
  %v1228 = vmax.f32 %v633, 0.0
  %v1229 = vmax.f32 %v638, 0.0
  %v1230 = vmax.f32 %v643, 0.0
  %v1231 = vmax.f32 %v648, 0.0
  %v1232 = vmax.f32 %v653, 0.0
  %v1233 = vmax.f32 %v658, 0.0
  %v1234 = vmax.f32 %v663, 0.0
  %v1235 = vmax.f32 %v668, 0.0
  %v1236 = vmax.f32 %v673, 0.0
  %v1237 = vmax.f32 %v678, 0.0
  %v1238 = vmax.f32 %v683, 0.0
  %v1239 = vmax.f32 %v688, 0.0
  %v1240 = vmax.f32 %v693, 0.0
  %v1241 = vmax.f32 %v698, 0.0
  %v1242 = vmax.f32 %v703, 0.0
  %v1243 = vmax.f32 %v708, 0.0
  %v1244 = vmax.f32 %v713, 0.0
  %v1245 = vmax.f32 %v718, 0.0
  %v1246 = vmax.f32 %v723, 0.0
  %v1247 = vmax.f32 %v728, 0.0
  %v1248 = vmax.f32 %v733, 0.0
  %v1249 = vmax.f32 %v738, 0.0
  %v1250 = vmax.f32 %v743, 0.0
  %v1251 = vmax.f32 %v748, 0.0
  %v1252 = vmax.f32 %v753, 0.0
  %v1253 = vmax.f32 %v758, 0.0
  %v1254 = vmax.f32 %v763, 0.0
  %v1255 = vmax.f32 %v768, 0.0
  %v1256 = vmax.f32 %v773, 0.0
  %v1257 = vmax.f32 %v778, 0.0
  %v1258 = vmax.f32 %v783, 0.0
  %v1259 = vmax.f32 %v788, 0.0
  %v1260 = vmax.f32 %v793, 0.0
  %v1261 = vmax.f32 %v798, 0.0
  %v1262 = vmax.f32 %v803, 0.0
  %v1263 = vmax.f32 %v808, 0.0
  %v1264 = vmax.f32 %v813, 0.0
  %v1265 = vmax.f32 %v818, 0.0
  %v1266 = vmax.f32 %v823, 0.0
  %v1267 = vmax.f32 %v828, 0.0
  %v1268 = vmax.f32 %v833, 0.0
  %v1269 = vmax.f32 %v838, 0.0
  %v1270 = vmax.f32 %v843, 0.0
  %v1271 = vmax.f32 %v848, 0.0
  %v1272 = vmax.f32 %v853, 0.0
  %v1273 = vmax.f32 %v858, 0.0
  %v1274 = vmax.f32 %v863, 0.0
  %v1275 = vmax.f32 %v868, 0.0
  %v1276 = vmax.f32 %v873, 0.0
  %v1277 = vmax.f32 %v878, 0.0
  %v1278 = vmax.f32 %v883, 0.0
  %v1279 = vmax.f32 %v888, 0.0
  %v1280 = vmax.f32 %v893, 0.0
  %v1281 = vmax.f32 %v898, 0.0
  %v1282 = vmax.f32 %v903, 0.0
  %v1283 = vmax.f32 %v908, 0.0
  %v1284 = vmax.f32 %v913, 0.0
  %v1285 = vmax.f32 %v918, 0.0
  %v1286 = vmax.f32 %v923, 0.0
  %v1287 = vmax.f32 %v928, 0.0
  %v1288 = vmax.f32 %v933, 0.0
  %v1289 = vmax.f32 %v938, 0.0
  %v1290 = vmax.f32 %v943, 0.0
  %v1291 = vmax.f32 %v948, 0.0
  %v1292 = vmax.f32 %v953, 0.0
  %v1293 = vmax.f32 %v958, 0.0
  %v1294 = vmax.f32 %v963, 0.0
  %v1295 = vmax.f32 %v968, 0.0
  %v1296 = vmax.f32 %v973, 0.0
  %v1297 = vmax.f32 %v978, 0.0
  %v1298 = vmax.f32 %v983, 0.0
  %v1299 = vmax.f32 %v988, 0.0
  %v1300 = vmax.f32 %v993, 0.0
  %v1301 = vmax.f32 %v998, 0.0
  %v1302 = vmax.f32 %v1003, 0.0
  %v1303 = vmax.f32 %v1008, 0.0
  %v1304 = vmax.f32 %v1013, 0.0
  %v1305 = vmax.f32 %v1018, 0.0
  %v1306 = vmax.f32 %v1023, 0.0
  %v1307 = vmax.f32 %v1028, 0.0
  %v1308 = vmax.f32 %v1033, 0.0
  %v1309 = vmax.f32 %v1038, 0.0
  %v1310 = vmax.f32 %v1043, 0.0
  %v1311 = vmax.f32 %v1048, 0.0
  %v1312 = vmax.f32 %v1053, 0.0
  %v1313 = vmax.f32 %v1058, 0.0
  %v1314 = vmax.f32 %v1063, 0.0
  %v1315 = vmax.f32 %v1068, 0.0
  %v1316 = vmax.f32 %v1073, 0.0
  %v1317 = vmax.f32 %v1078, 0.0
  %v1318 = vmax.f32 %v1083, 0.0
  %v1319 = vmax.f32 %v1088, 0.0
  %v1320 = vmax.f32 %v1093, 0.0
  %v1321 = vmax.f32 %v1098, 0.0
  %v1322 = vmax.f32 %v1103, 0.0
  %v1323 = vmax.f32 %v1108, 0.0
  %v1324 = vmax.f32 %v1113, 0.0
  %v1325 = vmax.f32 %v1118, 0.0
  %v1326 = vmax.f32 %v1123, 0.0
  %v1327 = vmax.f32 %v1128, 0.0
  %v1328 = vmax.f32 %v1133, 0.0
  %v1329 = vmax.f32 %v1138, 0.0
  %v1330 = vmax.f32 %v1143, 0.0
  %v1331 = vmax.f32 %v1148, 0.0
  %v1332 = vmax.f32 %v1153, 0.0
  %v1333 = vmax.f32 %v1158, 0.0
  %v1334 = vmax.f32 %v1163, 0.0
  %v1335 = vmax.f32 %v1168, 0.0
  %v1336 = vmax.f32 %v1173, 0.0
  %v1337 = vmax.f32 %v1178, 0.0
  %v1338 = vmax.f32 %v1183, 0.0
  %v1339 = vmax.f32 %v1188, 0.0
  %v1340 = vmax.f32 %v1193, 0.0
  %v1341 = vmax.f32 %v1198, 0.0
  %v1342 = vmax.f32 %v1203, 0.0
  %v1343 = vmax.f32 %v1208, 0.0
  %v1344 = vmax.f32 %v1213, 0.0
  %v1345 = vmax.f32 %v1218, 0.0
  %v1346 = vld [vmem:[%s3] sm:$0x1]
  %v1348 = vlaneseq
  %v1349 = vshrl.u32 %v1348, 7
  %v1350 = vsub.s32 0, %v1349
  %v1351 = vrot.slane %v1346, %v1350
  %v1353 = vmul.f32 %v1221, %v1351
  %v1354 = vmul.f32 %v1222, %v1351
  %v1355 = vmul.f32 %v1223, %v1351
  %v1356 = vmul.f32 %v1224, %v1351
  %v1357 = vmul.f32 %v1225, %v1351
  %v1358 = vmul.f32 %v1226, %v1351
  %v1359 = vmul.f32 %v1227, %v1351
  %v1360 = vmul.f32 %v1228, %v1351
  %v1361 = vmul.f32 %v1229, %v1351
  %v1362 = vmul.f32 %v1230, %v1351
  %v1363 = vmul.f32 %v1231, %v1351
  %v1364 = vmul.f32 %v1232, %v1351
  %v1365 = vmul.f32 %v1233, %v1351
  %v1366 = vmul.f32 %v1234, %v1351
  %v1367 = vmul.f32 %v1235, %v1351
  %v1368 = vmul.f32 %v1236, %v1351
  %v1369 = vmul.f32 %v1237, %v1351
  %v1370 = vmul.f32 %v1238, %v1351
  %v1371 = vmul.f32 %v1239, %v1351
  %v1372 = vmul.f32 %v1240, %v1351
  %v1373 = vmul.f32 %v1241, %v1351
  %v1374 = vmul.f32 %v1242, %v1351
  %v1375 = vmul.f32 %v1243, %v1351
  %v1376 = vmul.f32 %v1244, %v1351
  %v1377 = vmul.f32 %v1245, %v1351
  %v1378 = vmul.f32 %v1246, %v1351
  %v1379 = vmul.f32 %v1247, %v1351
  %v1380 = vmul.f32 %v1248, %v1351
  %v1381 = vmul.f32 %v1249, %v1351
  %v1382 = vmul.f32 %v1250, %v1351
  %v1383 = vmul.f32 %v1251, %v1351
  %v1384 = vmul.f32 %v1252, %v1351
  %v1385 = vmul.f32 %v1253, %v1351
  %v1386 = vmul.f32 %v1254, %v1351
  %v1387 = vmul.f32 %v1255, %v1351
  %v1388 = vmul.f32 %v1256, %v1351
  %v1389 = vmul.f32 %v1257, %v1351
  %v1390 = vmul.f32 %v1258, %v1351
  %v1391 = vmul.f32 %v1259, %v1351
  %v1392 = vmul.f32 %v1260, %v1351
  %v1393 = vmul.f32 %v1261, %v1351
  %v1394 = vmul.f32 %v1262, %v1351
  %v1395 = vmul.f32 %v1263, %v1351
  %v1396 = vmul.f32 %v1264, %v1351
  %v1397 = vmul.f32 %v1265, %v1351
  %v1398 = vmul.f32 %v1266, %v1351
  %v1399 = vmul.f32 %v1267, %v1351
  %v1400 = vmul.f32 %v1268, %v1351
  %v1401 = vmul.f32 %v1269, %v1351
  %v1402 = vmul.f32 %v1270, %v1351
  %v1403 = vmul.f32 %v1271, %v1351
  %v1404 = vmul.f32 %v1272, %v1351
  %v1405 = vmul.f32 %v1273, %v1351
  %v1406 = vmul.f32 %v1274, %v1351
  %v1407 = vmul.f32 %v1275, %v1351
  %v1408 = vmul.f32 %v1276, %v1351
  %v1409 = vmul.f32 %v1277, %v1351
  %v1410 = vmul.f32 %v1278, %v1351
  %v1411 = vmul.f32 %v1279, %v1351
  %v1412 = vmul.f32 %v1280, %v1351
  %v1413 = vmul.f32 %v1281, %v1351
  %v1414 = vmul.f32 %v1282, %v1351
  %v1415 = vmul.f32 %v1283, %v1351
  %v1416 = vmul.f32 %v1284, %v1351
  %v1417 = vmul.f32 %v1285, %v1351
  %v1418 = vmul.f32 %v1286, %v1351
  %v1419 = vmul.f32 %v1287, %v1351
  %v1420 = vmul.f32 %v1288, %v1351
  %v1421 = vmul.f32 %v1289, %v1351
  %v1422 = vmul.f32 %v1290, %v1351
  %v1423 = vmul.f32 %v1291, %v1351
  %v1424 = vmul.f32 %v1292, %v1351
  %v1425 = vmul.f32 %v1293, %v1351
  %v1426 = vmul.f32 %v1294, %v1351
  %v1427 = vmul.f32 %v1295, %v1351
  %v1428 = vmul.f32 %v1296, %v1351
  %v1429 = vmul.f32 %v1297, %v1351
  %v1430 = vmul.f32 %v1298, %v1351
  %v1431 = vmul.f32 %v1299, %v1351
  %v1432 = vmul.f32 %v1300, %v1351
  %v1433 = vmul.f32 %v1301, %v1351
  %v1434 = vmul.f32 %v1302, %v1351
  %v1435 = vmul.f32 %v1303, %v1351
  %v1436 = vmul.f32 %v1304, %v1351
  %v1437 = vmul.f32 %v1305, %v1351
  %v1438 = vmul.f32 %v1306, %v1351
  %v1439 = vmul.f32 %v1307, %v1351
  %v1440 = vmul.f32 %v1308, %v1351
  %v1441 = vmul.f32 %v1309, %v1351
  %v1442 = vmul.f32 %v1310, %v1351
  %v1443 = vmul.f32 %v1311, %v1351
  %v1444 = vmul.f32 %v1312, %v1351
  %v1445 = vmul.f32 %v1313, %v1351
  %v1446 = vmul.f32 %v1314, %v1351
  %v1447 = vmul.f32 %v1315, %v1351
  %v1448 = vmul.f32 %v1316, %v1351
  %v1449 = vmul.f32 %v1317, %v1351
  %v1450 = vmul.f32 %v1318, %v1351
  %v1451 = vmul.f32 %v1319, %v1351
  %v1452 = vmul.f32 %v1320, %v1351
  %v1453 = vmul.f32 %v1321, %v1351
  %v1454 = vmul.f32 %v1322, %v1351
  %v1455 = vmul.f32 %v1323, %v1351
  %v1456 = vmul.f32 %v1324, %v1351
  %v1457 = vmul.f32 %v1325, %v1351
  %v1458 = vmul.f32 %v1326, %v1351
  %v1459 = vmul.f32 %v1327, %v1351
  %v1460 = vmul.f32 %v1328, %v1351
  %v1461 = vmul.f32 %v1329, %v1351
  %v1462 = vmul.f32 %v1330, %v1351
  %v1463 = vmul.f32 %v1331, %v1351
  %v1464 = vmul.f32 %v1332, %v1351
  %v1465 = vmul.f32 %v1333, %v1351
  %v1466 = vmul.f32 %v1334, %v1351
  %v1467 = vmul.f32 %v1335, %v1351
  %v1468 = vmul.f32 %v1336, %v1351
  %v1469 = vmul.f32 %v1337, %v1351
  %v1470 = vmul.f32 %v1338, %v1351
  %v1471 = vmul.f32 %v1339, %v1351
  %v1472 = vmul.f32 %v1340, %v1351
  %v1473 = vmul.f32 %v1341, %v1351
  %v1474 = vmul.f32 %v1342, %v1351
  %v1475 = vmul.f32 %v1343, %v1351
  %v1476 = vmul.f32 %v1344, %v1351
  %v1477 = vmul.f32 %v1345, %v1351
  %1478 = vadd.xlane.f32.xlu0 %v1353
  %v1479 = vpop.xlane.xlu0 %1478
  %1480 = vadd.xlane.f32.xlu0 %v1354
  %v1481 = vpop.xlane.xlu0 %1480
  %1482 = vadd.xlane.f32.xlu0 %v1355
  %v1483 = vpop.xlane.xlu0 %1482
  %1484 = vadd.xlane.f32.xlu0 %v1356
  %v1485 = vpop.xlane.xlu0 %1484
  %1486 = vadd.xlane.f32.xlu0 %v1357
  %v1487 = vpop.xlane.xlu0 %1486
  %1488 = vadd.xlane.f32.xlu0 %v1358
  %v1489 = vpop.xlane.xlu0 %1488
  %1490 = vadd.xlane.f32.xlu0 %v1359
  %v1491 = vpop.xlane.xlu0 %1490
  %1492 = vadd.xlane.f32.xlu0 %v1360
  %v1493 = vpop.xlane.xlu0 %1492
  %1494 = vadd.xlane.f32.xlu0 %v1361
  %v1495 = vpop.xlane.xlu0 %1494
  %1496 = vadd.xlane.f32.xlu0 %v1362
  %v1497 = vpop.xlane.xlu0 %1496
  %1498 = vadd.xlane.f32.xlu0 %v1363
  %v1499 = vpop.xlane.xlu0 %1498
  %1500 = vadd.xlane.f32.xlu0 %v1364
  %v1501 = vpop.xlane.xlu0 %1500
  %1502 = vadd.xlane.f32.xlu0 %v1365
  %v1503 = vpop.xlane.xlu0 %1502
  %1504 = vadd.xlane.f32.xlu0 %v1366
  %v1505 = vpop.xlane.xlu0 %1504
  %1506 = vadd.xlane.f32.xlu0 %v1367
  %v1507 = vpop.xlane.xlu0 %1506
  %1508 = vadd.xlane.f32.xlu0 %v1368
  %v1509 = vpop.xlane.xlu0 %1508
  %1510 = vadd.xlane.f32.xlu0 %v1369
  %v1511 = vpop.xlane.xlu0 %1510
  %1512 = vadd.xlane.f32.xlu0 %v1370
  %v1513 = vpop.xlane.xlu0 %1512
  %1514 = vadd.xlane.f32.xlu0 %v1371
  %v1515 = vpop.xlane.xlu0 %1514
  %1516 = vadd.xlane.f32.xlu0 %v1372
  %v1517 = vpop.xlane.xlu0 %1516
  %1518 = vadd.xlane.f32.xlu0 %v1373
  %v1519 = vpop.xlane.xlu0 %1518
  %1520 = vadd.xlane.f32.xlu0 %v1374
  %v1521 = vpop.xlane.xlu0 %1520
  %1522 = vadd.xlane.f32.xlu0 %v1375
  %v1523 = vpop.xlane.xlu0 %1522
  %1524 = vadd.xlane.f32.xlu0 %v1376
  %v1525 = vpop.xlane.xlu0 %1524
  %1526 = vadd.xlane.f32.xlu0 %v1377
  %v1527 = vpop.xlane.xlu0 %1526
  %1528 = vadd.xlane.f32.xlu0 %v1378
  %v1529 = vpop.xlane.xlu0 %1528
  %1530 = vadd.xlane.f32.xlu0 %v1379
  %v1531 = vpop.xlane.xlu0 %1530
  %1532 = vadd.xlane.f32.xlu0 %v1380
  %v1533 = vpop.xlane.xlu0 %1532
  %1534 = vadd.xlane.f32.xlu0 %v1381
  %v1535 = vpop.xlane.xlu0 %1534
  %1536 = vadd.xlane.f32.xlu0 %v1382
  %v1537 = vpop.xlane.xlu0 %1536
  %1538 = vadd.xlane.f32.xlu0 %v1383
  %v1539 = vpop.xlane.xlu0 %1538
  %1540 = vadd.xlane.f32.xlu0 %v1384
  %v1541 = vpop.xlane.xlu0 %1540
  %1542 = vadd.xlane.f32.xlu0 %v1385
  %v1543 = vpop.xlane.xlu0 %1542
  %1544 = vadd.xlane.f32.xlu0 %v1386
  %v1545 = vpop.xlane.xlu0 %1544
  %1546 = vadd.xlane.f32.xlu0 %v1387
  %v1547 = vpop.xlane.xlu0 %1546
  %1548 = vadd.xlane.f32.xlu0 %v1388
  %v1549 = vpop.xlane.xlu0 %1548
  %1550 = vadd.xlane.f32.xlu0 %v1389
  %v1551 = vpop.xlane.xlu0 %1550
  %1552 = vadd.xlane.f32.xlu0 %v1390
  %v1553 = vpop.xlane.xlu0 %1552
  %1554 = vadd.xlane.f32.xlu0 %v1391
  %v1555 = vpop.xlane.xlu0 %1554
  %1556 = vadd.xlane.f32.xlu0 %v1392
  %v1557 = vpop.xlane.xlu0 %1556
  %1558 = vadd.xlane.f32.xlu0 %v1393
  %v1559 = vpop.xlane.xlu0 %1558
  %1560 = vadd.xlane.f32.xlu0 %v1394
  %v1561 = vpop.xlane.xlu0 %1560
  %1562 = vadd.xlane.f32.xlu0 %v1395
  %v1563 = vpop.xlane.xlu0 %1562
  %1564 = vadd.xlane.f32.xlu0 %v1396
  %v1565 = vpop.xlane.xlu0 %1564
  %1566 = vadd.xlane.f32.xlu0 %v1397
  %v1567 = vpop.xlane.xlu0 %1566
  %1568 = vadd.xlane.f32.xlu0 %v1398
  %v1569 = vpop.xlane.xlu0 %1568
  %1570 = vadd.xlane.f32.xlu0 %v1399
  %v1571 = vpop.xlane.xlu0 %1570
  %1572 = vadd.xlane.f32.xlu0 %v1400
  %v1573 = vpop.xlane.xlu0 %1572
  %1574 = vadd.xlane.f32.xlu0 %v1401
  %v1575 = vpop.xlane.xlu0 %1574
  %1576 = vadd.xlane.f32.xlu0 %v1402
  %v1577 = vpop.xlane.xlu0 %1576
  %1578 = vadd.xlane.f32.xlu0 %v1403
  %v1579 = vpop.xlane.xlu0 %1578
  %1580 = vadd.xlane.f32.xlu0 %v1404
  %v1581 = vpop.xlane.xlu0 %1580
  %1582 = vadd.xlane.f32.xlu0 %v1405
  %v1583 = vpop.xlane.xlu0 %1582
  %1584 = vadd.xlane.f32.xlu0 %v1406
  %v1585 = vpop.xlane.xlu0 %1584
  %1586 = vadd.xlane.f32.xlu0 %v1407
  %v1587 = vpop.xlane.xlu0 %1586
  %1588 = vadd.xlane.f32.xlu0 %v1408
  %v1589 = vpop.xlane.xlu0 %1588
  %1590 = vadd.xlane.f32.xlu0 %v1409
  %v1591 = vpop.xlane.xlu0 %1590
  %1592 = vadd.xlane.f32.xlu0 %v1410
  %v1593 = vpop.xlane.xlu0 %1592
  %1594 = vadd.xlane.f32.xlu0 %v1411
  %v1595 = vpop.xlane.xlu0 %1594
  %1596 = vadd.xlane.f32.xlu0 %v1412
  %v1597 = vpop.xlane.xlu0 %1596
  %1598 = vadd.xlane.f32.xlu0 %v1413
  %v1599 = vpop.xlane.xlu0 %1598
  %1600 = vadd.xlane.f32.xlu0 %v1414
  %v1601 = vpop.xlane.xlu0 %1600
  %1602 = vadd.xlane.f32.xlu0 %v1415
  %v1603 = vpop.xlane.xlu0 %1602
  %1604 = vadd.xlane.f32.xlu0 %v1416
  %v1605 = vpop.xlane.xlu0 %1604
  %1606 = vadd.xlane.f32.xlu0 %v1417
  %v1607 = vpop.xlane.xlu0 %1606
  %1608 = vadd.xlane.f32.xlu0 %v1418
  %v1609 = vpop.xlane.xlu0 %1608
  %1610 = vadd.xlane.f32.xlu0 %v1419
  %v1611 = vpop.xlane.xlu0 %1610
  %1612 = vadd.xlane.f32.xlu0 %v1420
  %v1613 = vpop.xlane.xlu0 %1612
  %1614 = vadd.xlane.f32.xlu0 %v1421
  %v1615 = vpop.xlane.xlu0 %1614
  %1616 = vadd.xlane.f32.xlu0 %v1422
  %v1617 = vpop.xlane.xlu0 %1616
  %1618 = vadd.xlane.f32.xlu0 %v1423
  %v1619 = vpop.xlane.xlu0 %1618
  %1620 = vadd.xlane.f32.xlu0 %v1424
  %v1621 = vpop.xlane.xlu0 %1620
  %1622 = vadd.xlane.f32.xlu0 %v1425
  %v1623 = vpop.xlane.xlu0 %1622
  %1624 = vadd.xlane.f32.xlu0 %v1426
  %v1625 = vpop.xlane.xlu0 %1624
  %1626 = vadd.xlane.f32.xlu0 %v1427
  %v1627 = vpop.xlane.xlu0 %1626
  %1628 = vadd.xlane.f32.xlu0 %v1428
  %v1629 = vpop.xlane.xlu0 %1628
  %1630 = vadd.xlane.f32.xlu0 %v1429
  %v1631 = vpop.xlane.xlu0 %1630
  %1632 = vadd.xlane.f32.xlu0 %v1430
  %v1633 = vpop.xlane.xlu0 %1632
  %1634 = vadd.xlane.f32.xlu0 %v1431
  %v1635 = vpop.xlane.xlu0 %1634
  %1636 = vadd.xlane.f32.xlu0 %v1432
  %v1637 = vpop.xlane.xlu0 %1636
  %1638 = vadd.xlane.f32.xlu0 %v1433
  %v1639 = vpop.xlane.xlu0 %1638
  %1640 = vadd.xlane.f32.xlu0 %v1434
  %v1641 = vpop.xlane.xlu0 %1640
  %1642 = vadd.xlane.f32.xlu0 %v1435
  %v1643 = vpop.xlane.xlu0 %1642
  %1644 = vadd.xlane.f32.xlu0 %v1436
  %v1645 = vpop.xlane.xlu0 %1644
  %1646 = vadd.xlane.f32.xlu0 %v1437
  %v1647 = vpop.xlane.xlu0 %1646
  %1648 = vadd.xlane.f32.xlu0 %v1438
  %v1649 = vpop.xlane.xlu0 %1648
  %1650 = vadd.xlane.f32.xlu0 %v1439
  %v1651 = vpop.xlane.xlu0 %1650
  %1652 = vadd.xlane.f32.xlu0 %v1440
  %v1653 = vpop.xlane.xlu0 %1652
  %1654 = vadd.xlane.f32.xlu0 %v1441
  %v1655 = vpop.xlane.xlu0 %1654
  %1656 = vadd.xlane.f32.xlu0 %v1442
  %v1657 = vpop.xlane.xlu0 %1656
  %1658 = vadd.xlane.f32.xlu0 %v1443
  %v1659 = vpop.xlane.xlu0 %1658
  %1660 = vadd.xlane.f32.xlu0 %v1444
  %v1661 = vpop.xlane.xlu0 %1660
  %1662 = vadd.xlane.f32.xlu0 %v1445
  %v1663 = vpop.xlane.xlu0 %1662
  %1664 = vadd.xlane.f32.xlu0 %v1446
  %v1665 = vpop.xlane.xlu0 %1664
  %1666 = vadd.xlane.f32.xlu0 %v1447
  %v1667 = vpop.xlane.xlu0 %1666
  %1668 = vadd.xlane.f32.xlu0 %v1448
  %v1669 = vpop.xlane.xlu0 %1668
  %1670 = vadd.xlane.f32.xlu0 %v1449
  %v1671 = vpop.xlane.xlu0 %1670
  %1672 = vadd.xlane.f32.xlu0 %v1450
  %v1673 = vpop.xlane.xlu0 %1672
  %1674 = vadd.xlane.f32.xlu0 %v1451
  %v1675 = vpop.xlane.xlu0 %1674
  %1676 = vadd.xlane.f32.xlu0 %v1452
  %v1677 = vpop.xlane.xlu0 %1676
  %1678 = vadd.xlane.f32.xlu0 %v1453
  %v1679 = vpop.xlane.xlu0 %1678
  %1680 = vadd.xlane.f32.xlu0 %v1454
  %v1681 = vpop.xlane.xlu0 %1680
  %1682 = vadd.xlane.f32.xlu0 %v1455
  %v1683 = vpop.xlane.xlu0 %1682
  %1684 = vadd.xlane.f32.xlu0 %v1456
  %v1685 = vpop.xlane.xlu0 %1684
  %1686 = vadd.xlane.f32.xlu0 %v1457
  %v1687 = vpop.xlane.xlu0 %1686
  %1688 = vadd.xlane.f32.xlu0 %v1458
  %v1689 = vpop.xlane.xlu0 %1688
  %1690 = vadd.xlane.f32.xlu0 %v1459
  %v1691 = vpop.xlane.xlu0 %1690
  %1692 = vadd.xlane.f32.xlu0 %v1460
  %v1693 = vpop.xlane.xlu0 %1692
  %1694 = vadd.xlane.f32.xlu0 %v1461
  %v1695 = vpop.xlane.xlu0 %1694
  %1696 = vadd.xlane.f32.xlu0 %v1462
  %v1697 = vpop.xlane.xlu0 %1696
  %1698 = vadd.xlane.f32.xlu0 %v1463
  %v1699 = vpop.xlane.xlu0 %1698
  %1700 = vadd.xlane.f32.xlu0 %v1464
  %v1701 = vpop.xlane.xlu0 %1700
  %1702 = vadd.xlane.f32.xlu0 %v1465
  %v1703 = vpop.xlane.xlu0 %1702
  %1704 = vadd.xlane.f32.xlu0 %v1466
  %v1705 = vpop.xlane.xlu0 %1704
  %1706 = vadd.xlane.f32.xlu0 %v1467
  %v1707 = vpop.xlane.xlu0 %1706
  %1708 = vadd.xlane.f32.xlu0 %v1468
  %v1709 = vpop.xlane.xlu0 %1708
  %1710 = vadd.xlane.f32.xlu0 %v1469
  %v1711 = vpop.xlane.xlu0 %1710
  %1712 = vadd.xlane.f32.xlu0 %v1470
  %v1713 = vpop.xlane.xlu0 %1712
  %1714 = vadd.xlane.f32.xlu0 %v1471
  %v1715 = vpop.xlane.xlu0 %1714
  %1716 = vadd.xlane.f32.xlu0 %v1472
  %v1717 = vpop.xlane.xlu0 %1716
  %1718 = vadd.xlane.f32.xlu0 %v1473
  %v1719 = vpop.xlane.xlu0 %1718
  %1720 = vadd.xlane.f32.xlu0 %v1474
  %v1721 = vpop.xlane.xlu0 %1720
  %1722 = vadd.xlane.f32.xlu0 %v1475
  %v1723 = vpop.xlane.xlu0 %1722
  %1724 = vadd.xlane.f32.xlu0 %v1476
  %v1725 = vpop.xlane.xlu0 %1724
  %1726 = vadd.xlane.f32.xlu0 %v1477
  %v1727 = vpop.xlane.xlu0 %1726
  %s1728 = sld [smem:[#allocation2]]
  %v1729 = vstv %s1728
  %v1730 = vadd.f32 %v1479, %v1729
  %v1731 = vadd.f32 %v1481, %v1729
  %v1732 = vadd.f32 %v1483, %v1729
  %v1733 = vadd.f32 %v1485, %v1729
  %v1734 = vadd.f32 %v1487, %v1729
  %v1735 = vadd.f32 %v1489, %v1729
  %v1736 = vadd.f32 %v1491, %v1729
  %v1737 = vadd.f32 %v1493, %v1729
  %v1738 = vadd.f32 %v1495, %v1729
  %v1739 = vadd.f32 %v1497, %v1729
  %v1740 = vadd.f32 %v1499, %v1729
  %v1741 = vadd.f32 %v1501, %v1729
  %v1742 = vadd.f32 %v1503, %v1729
  %v1743 = vadd.f32 %v1505, %v1729
  %v1744 = vadd.f32 %v1507, %v1729
  %v1745 = vadd.f32 %v1509, %v1729
  %v1746 = vadd.f32 %v1511, %v1729
  %v1747 = vadd.f32 %v1513, %v1729
  %v1748 = vadd.f32 %v1515, %v1729
  %v1749 = vadd.f32 %v1517, %v1729
  %v1750 = vadd.f32 %v1519, %v1729
  %v1751 = vadd.f32 %v1521, %v1729
  %v1752 = vadd.f32 %v1523, %v1729
  %v1753 = vadd.f32 %v1525, %v1729
  %v1754 = vadd.f32 %v1527, %v1729
  %v1755 = vadd.f32 %v1529, %v1729
  %v1756 = vadd.f32 %v1531, %v1729
  %v1757 = vadd.f32 %v1533, %v1729
  %v1758 = vadd.f32 %v1535, %v1729
  %v1759 = vadd.f32 %v1537, %v1729
  %v1760 = vadd.f32 %v1539, %v1729
  %v1761 = vadd.f32 %v1541, %v1729
  %v1762 = vadd.f32 %v1543, %v1729
  %v1763 = vadd.f32 %v1545, %v1729
  %v1764 = vadd.f32 %v1547, %v1729
  %v1765 = vadd.f32 %v1549, %v1729
  %v1766 = vadd.f32 %v1551, %v1729
  %v1767 = vadd.f32 %v1553, %v1729
  %v1768 = vadd.f32 %v1555, %v1729
  %v1769 = vadd.f32 %v1557, %v1729
  %v1770 = vadd.f32 %v1559, %v1729
  %v1771 = vadd.f32 %v1561, %v1729
  %v1772 = vadd.f32 %v1563, %v1729
  %v1773 = vadd.f32 %v1565, %v1729
  %v1774 = vadd.f32 %v1567, %v1729
  %v1775 = vadd.f32 %v1569, %v1729
  %v1776 = vadd.f32 %v1571, %v1729
  %v1777 = vadd.f32 %v1573, %v1729
  %v1778 = vadd.f32 %v1575, %v1729
  %v1779 = vadd.f32 %v1577, %v1729
  %v1780 = vadd.f32 %v1579, %v1729
  %v1781 = vadd.f32 %v1581, %v1729
  %v1782 = vadd.f32 %v1583, %v1729
  %v1783 = vadd.f32 %v1585, %v1729
  %v1784 = vadd.f32 %v1587, %v1729
  %v1785 = vadd.f32 %v1589, %v1729
  %v1786 = vadd.f32 %v1591, %v1729
  %v1787 = vadd.f32 %v1593, %v1729
  %v1788 = vadd.f32 %v1595, %v1729
  %v1789 = vadd.f32 %v1597, %v1729
  %v1790 = vadd.f32 %v1599, %v1729
  %v1791 = vadd.f32 %v1601, %v1729
  %v1792 = vadd.f32 %v1603, %v1729
  %v1793 = vadd.f32 %v1605, %v1729
  %v1794 = vadd.f32 %v1607, %v1729
  %v1795 = vadd.f32 %v1609, %v1729
  %v1796 = vadd.f32 %v1611, %v1729
  %v1797 = vadd.f32 %v1613, %v1729
  %v1798 = vadd.f32 %v1615, %v1729
  %v1799 = vadd.f32 %v1617, %v1729
  %v1800 = vadd.f32 %v1619, %v1729
  %v1801 = vadd.f32 %v1621, %v1729
  %v1802 = vadd.f32 %v1623, %v1729
  %v1803 = vadd.f32 %v1625, %v1729
  %v1804 = vadd.f32 %v1627, %v1729
  %v1805 = vadd.f32 %v1629, %v1729
  %v1806 = vadd.f32 %v1631, %v1729
  %v1807 = vadd.f32 %v1633, %v1729
  %v1808 = vadd.f32 %v1635, %v1729
  %v1809 = vadd.f32 %v1637, %v1729
  %v1810 = vadd.f32 %v1639, %v1729
  %v1811 = vadd.f32 %v1641, %v1729
  %v1812 = vadd.f32 %v1643, %v1729
  %v1813 = vadd.f32 %v1645, %v1729
  %v1814 = vadd.f32 %v1647, %v1729
  %v1815 = vadd.f32 %v1649, %v1729
  %v1816 = vadd.f32 %v1651, %v1729
  %v1817 = vadd.f32 %v1653, %v1729
  %v1818 = vadd.f32 %v1655, %v1729
  %v1819 = vadd.f32 %v1657, %v1729
  %v1820 = vadd.f32 %v1659, %v1729
  %v1821 = vadd.f32 %v1661, %v1729
  %v1822 = vadd.f32 %v1663, %v1729
  %v1823 = vadd.f32 %v1665, %v1729
  %v1824 = vadd.f32 %v1667, %v1729
  %v1825 = vadd.f32 %v1669, %v1729
  %v1826 = vadd.f32 %v1671, %v1729
  %v1827 = vadd.f32 %v1673, %v1729
  %v1828 = vadd.f32 %v1675, %v1729
  %v1829 = vadd.f32 %v1677, %v1729
  %v1830 = vadd.f32 %v1679, %v1729
  %v1831 = vadd.f32 %v1681, %v1729
  %v1832 = vadd.f32 %v1683, %v1729
  %v1833 = vadd.f32 %v1685, %v1729
  %v1834 = vadd.f32 %v1687, %v1729
  %v1835 = vadd.f32 %v1689, %v1729
  %v1836 = vadd.f32 %v1691, %v1729
  %v1837 = vadd.f32 %v1693, %v1729
  %v1838 = vadd.f32 %v1695, %v1729
  %v1839 = vadd.f32 %v1697, %v1729
  %v1840 = vadd.f32 %v1699, %v1729
  %v1841 = vadd.f32 %v1701, %v1729
  %v1842 = vadd.f32 %v1703, %v1729
  %v1843 = vadd.f32 %v1705, %v1729
  %v1844 = vadd.f32 %v1707, %v1729
  %v1845 = vadd.f32 %v1709, %v1729
  %v1846 = vadd.f32 %v1711, %v1729
  %v1847 = vadd.f32 %v1713, %v1729
  %v1848 = vadd.f32 %v1715, %v1729
  %v1849 = vadd.f32 %v1717, %v1729
  %v1850 = vadd.f32 %v1719, %v1729
  %v1851 = vadd.f32 %v1721, %v1729
  %v1852 = vadd.f32 %v1723, %v1729
  %v1853 = vadd.f32 %v1725, %v1729
  %v1854 = vadd.f32 %v1727, %v1729
  %vm1855 = vcmask 7168
  %1856 = vst.msk [vmem:[%s5] sm:$0xff] %vm1855, %v1730
  %1857 = vst.msk [vmem:[%s5 + $0x8] sm:$0xff] %vm1855, %v1731
  %1858 = vst.msk [vmem:[%s5 + $0x10] sm:$0xff] %vm1855, %v1732
  %1859 = vst.msk [vmem:[%s5 + $0x18] sm:$0xff] %vm1855, %v1733
  %1860 = vst.msk [vmem:[%s5 + $0x20] sm:$0xff] %vm1855, %v1734
  %1861 = vst.msk [vmem:[%s5 + $0x28] sm:$0xff] %vm1855, %v1735
  %1862 = vst.msk [vmem:[%s5 + $0x30] sm:$0xff] %vm1855, %v1736
  %1863 = vst.msk [vmem:[%s5 + $0x38] sm:$0xff] %vm1855, %v1737
  %1864 = vst.msk [vmem:[%s5 + $0x40] sm:$0xff] %vm1855, %v1738
  %1865 = vst.msk [vmem:[%s5 + $0x48] sm:$0xff] %vm1855, %v1739
  %1866 = vst.msk [vmem:[%s5 + $0x50] sm:$0xff] %vm1855, %v1740
  %1867 = vst.msk [vmem:[%s5 + $0x58] sm:$0xff] %vm1855, %v1741
  %1868 = vst.msk [vmem:[%s5 + $0x60] sm:$0xff] %vm1855, %v1742
  %1869 = vst.msk [vmem:[%s5 + $0x68] sm:$0xff] %vm1855, %v1743
  %1870 = vst.msk [vmem:[%s5 + $0x70] sm:$0xff] %vm1855, %v1744
  %1871 = vst.msk [vmem:[%s5 + $0x78] sm:$0xff] %vm1855, %v1745
  %1872 = vst.msk [vmem:[%s5 + $0x80] sm:$0xff] %vm1855, %v1746
  %1873 = vst.msk [vmem:[%s5 + $0x88] sm:$0xff] %vm1855, %v1747
  %1874 = vst.msk [vmem:[%s5 + $0x90] sm:$0xff] %vm1855, %v1748
  %1875 = vst.msk [vmem:[%s5 + $0x98] sm:$0xff] %vm1855, %v1749
  %1876 = vst.msk [vmem:[%s5 + $0xa0] sm:$0xff] %vm1855, %v1750
  %1877 = vst.msk [vmem:[%s5 + $0xa8] sm:$0xff] %vm1855, %v1751
  %1878 = vst.msk [vmem:[%s5 + $0xb0] sm:$0xff] %vm1855, %v1752
  %1879 = vst.msk [vmem:[%s5 + $0xb8] sm:$0xff] %vm1855, %v1753
  %1880 = vst.msk [vmem:[%s5 + $0xc0] sm:$0xff] %vm1855, %v1754
  %1881 = vst.msk [vmem:[%s5 + $0xc8] sm:$0xff] %vm1855, %v1755
  %1882 = vst.msk [vmem:[%s5 + $0xd0] sm:$0xff] %vm1855, %v1756
  %1883 = vst.msk [vmem:[%s5 + $0xd8] sm:$0xff] %vm1855, %v1757
  %1884 = vst.msk [vmem:[%s5 + $0xe0] sm:$0xff] %vm1855, %v1758
  %1885 = vst.msk [vmem:[%s5 + $0xe8] sm:$0xff] %vm1855, %v1759
  %1886 = vst.msk [vmem:[%s5 + $0xf0] sm:$0xff] %vm1855, %v1760
  %1887 = vst.msk [vmem:[%s5 + $0xf8] sm:$0xff] %vm1855, %v1761
  %1888 = vst.msk [vmem:[%s5 + $0x100] sm:$0xff] %vm1855, %v1762
  %1889 = vst.msk [vmem:[%s5 + $0x108] sm:$0xff] %vm1855, %v1763
  %1890 = vst.msk [vmem:[%s5 + $0x110] sm:$0xff] %vm1855, %v1764
  %1891 = vst.msk [vmem:[%s5 + $0x118] sm:$0xff] %vm1855, %v1765
  %1892 = vst.msk [vmem:[%s5 + $0x120] sm:$0xff] %vm1855, %v1766
  %1893 = vst.msk [vmem:[%s5 + $0x128] sm:$0xff] %vm1855, %v1767
  %1894 = vst.msk [vmem:[%s5 + $0x130] sm:$0xff] %vm1855, %v1768
  %1895 = vst.msk [vmem:[%s5 + $0x138] sm:$0xff] %vm1855, %v1769
  %1896 = vst.msk [vmem:[%s5 + $0x140] sm:$0xff] %vm1855, %v1770
  %1897 = vst.msk [vmem:[%s5 + $0x148] sm:$0xff] %vm1855, %v1771
  %1898 = vst.msk [vmem:[%s5 + $0x150] sm:$0xff] %vm1855, %v1772
  %1899 = vst.msk [vmem:[%s5 + $0x158] sm:$0xff] %vm1855, %v1773
  %1900 = vst.msk [vmem:[%s5 + $0x160] sm:$0xff] %vm1855, %v1774
  %1901 = vst.msk [vmem:[%s5 + $0x168] sm:$0xff] %vm1855, %v1775
  %1902 = vst.msk [vmem:[%s5 + $0x170] sm:$0xff] %vm1855, %v1776
  %1903 = vst.msk [vmem:[%s5 + $0x178] sm:$0xff] %vm1855, %v1777
  %1904 = vst.msk [vmem:[%s5 + $0x180] sm:$0xff] %vm1855, %v1778
  %1905 = vst.msk [vmem:[%s5 + $0x188] sm:$0xff] %vm1855, %v1779
  %1906 = vst.msk [vmem:[%s5 + $0x190] sm:$0xff] %vm1855, %v1780
  %1907 = vst.msk [vmem:[%s5 + $0x198] sm:$0xff] %vm1855, %v1781
  %1908 = vst.msk [vmem:[%s5 + $0x1a0] sm:$0xff] %vm1855, %v1782
  %1909 = vst.msk [vmem:[%s5 + $0x1a8] sm:$0xff] %vm1855, %v1783
  %1910 = vst.msk [vmem:[%s5 + $0x1b0] sm:$0xff] %vm1855, %v1784
  %1911 = vst.msk [vmem:[%s5 + $0x1b8] sm:$0xff] %vm1855, %v1785
  %1912 = vst.msk [vmem:[%s5 + $0x1c0] sm:$0xff] %vm1855, %v1786
  %1913 = vst.msk [vmem:[%s5 + $0x1c8] sm:$0xff] %vm1855, %v1787
  %1914 = vst.msk [vmem:[%s5 + $0x1d0] sm:$0xff] %vm1855, %v1788
  %1915 = vst.msk [vmem:[%s5 + $0x1d8] sm:$0xff] %vm1855, %v1789
  %1916 = vst.msk [vmem:[%s5 + $0x1e0] sm:$0xff] %vm1855, %v1790
  %1917 = vst.msk [vmem:[%s5 + $0x1e8] sm:$0xff] %vm1855, %v1791
  %1918 = vst.msk [vmem:[%s5 + $0x1f0] sm:$0xff] %vm1855, %v1792
  %1919 = vst.msk [vmem:[%s5 + $0x1f8] sm:$0xff] %vm1855, %v1793
  %1920 = vst.msk [vmem:[%s5 + $0x200] sm:$0xff] %vm1855, %v1794
  %1921 = vst.msk [vmem:[%s5 + $0x208] sm:$0xff] %vm1855, %v1795
  %1922 = vst.msk [vmem:[%s5 + $0x210] sm:$0xff] %vm1855, %v1796
  %1923 = vst.msk [vmem:[%s5 + $0x218] sm:$0xff] %vm1855, %v1797
  %1924 = vst.msk [vmem:[%s5 + $0x220] sm:$0xff] %vm1855, %v1798
  %1925 = vst.msk [vmem:[%s5 + $0x228] sm:$0xff] %vm1855, %v1799
  %1926 = vst.msk [vmem:[%s5 + $0x230] sm:$0xff] %vm1855, %v1800
  %1927 = vst.msk [vmem:[%s5 + $0x238] sm:$0xff] %vm1855, %v1801
  %1928 = vst.msk [vmem:[%s5 + $0x240] sm:$0xff] %vm1855, %v1802
  %1929 = vst.msk [vmem:[%s5 + $0x248] sm:$0xff] %vm1855, %v1803
  %1930 = vst.msk [vmem:[%s5 + $0x250] sm:$0xff] %vm1855, %v1804
  %1931 = vst.msk [vmem:[%s5 + $0x258] sm:$0xff] %vm1855, %v1805
  %1932 = vst.msk [vmem:[%s5 + $0x260] sm:$0xff] %vm1855, %v1806
  %1933 = vst.msk [vmem:[%s5 + $0x268] sm:$0xff] %vm1855, %v1807
  %1934 = vst.msk [vmem:[%s5 + $0x270] sm:$0xff] %vm1855, %v1808
  %1935 = vst.msk [vmem:[%s5 + $0x278] sm:$0xff] %vm1855, %v1809
  %1936 = vst.msk [vmem:[%s5 + $0x280] sm:$0xff] %vm1855, %v1810
  %1937 = vst.msk [vmem:[%s5 + $0x288] sm:$0xff] %vm1855, %v1811
  %1938 = vst.msk [vmem:[%s5 + $0x290] sm:$0xff] %vm1855, %v1812
  %1939 = vst.msk [vmem:[%s5 + $0x298] sm:$0xff] %vm1855, %v1813
  %1940 = vst.msk [vmem:[%s5 + $0x2a0] sm:$0xff] %vm1855, %v1814
  %1941 = vst.msk [vmem:[%s5 + $0x2a8] sm:$0xff] %vm1855, %v1815
  %1942 = vst.msk [vmem:[%s5 + $0x2b0] sm:$0xff] %vm1855, %v1816
  %1943 = vst.msk [vmem:[%s5 + $0x2b8] sm:$0xff] %vm1855, %v1817
  %1944 = vst.msk [vmem:[%s5 + $0x2c0] sm:$0xff] %vm1855, %v1818
  %1945 = vst.msk [vmem:[%s5 + $0x2c8] sm:$0xff] %vm1855, %v1819
  %1946 = vst.msk [vmem:[%s5 + $0x2d0] sm:$0xff] %vm1855, %v1820
  %1947 = vst.msk [vmem:[%s5 + $0x2d8] sm:$0xff] %vm1855, %v1821
  %1948 = vst.msk [vmem:[%s5 + $0x2e0] sm:$0xff] %vm1855, %v1822
  %1949 = vst.msk [vmem:[%s5 + $0x2e8] sm:$0xff] %vm1855, %v1823
  %1950 = vst.msk [vmem:[%s5 + $0x2f0] sm:$0xff] %vm1855, %v1824
  %1951 = vst.msk [vmem:[%s5 + $0x2f8] sm:$0xff] %vm1855, %v1825
  %1952 = vst.msk [vmem:[%s5 + $0x300] sm:$0xff] %vm1855, %v1826
  %1953 = vst.msk [vmem:[%s5 + $0x308] sm:$0xff] %vm1855, %v1827
  %1954 = vst.msk [vmem:[%s5 + $0x310] sm:$0xff] %vm1855, %v1828
  %1955 = vst.msk [vmem:[%s5 + $0x318] sm:$0xff] %vm1855, %v1829
  %1956 = vst.msk [vmem:[%s5 + $0x320] sm:$0xff] %vm1855, %v1830
  %1957 = vst.msk [vmem:[%s5 + $0x328] sm:$0xff] %vm1855, %v1831
  %1958 = vst.msk [vmem:[%s5 + $0x330] sm:$0xff] %vm1855, %v1832
  %1959 = vst.msk [vmem:[%s5 + $0x338] sm:$0xff] %vm1855, %v1833
  %1960 = vst.msk [vmem:[%s5 + $0x340] sm:$0xff] %vm1855, %v1834
  %1961 = vst.msk [vmem:[%s5 + $0x348] sm:$0xff] %vm1855, %v1835
  %1962 = vst.msk [vmem:[%s5 + $0x350] sm:$0xff] %vm1855, %v1836
  %1963 = vst.msk [vmem:[%s5 + $0x358] sm:$0xff] %vm1855, %v1837
  %1964 = vst.msk [vmem:[%s5 + $0x360] sm:$0xff] %vm1855, %v1838
  %1965 = vst.msk [vmem:[%s5 + $0x368] sm:$0xff] %vm1855, %v1839
  %1966 = vst.msk [vmem:[%s5 + $0x370] sm:$0xff] %vm1855, %v1840
  %1967 = vst.msk [vmem:[%s5 + $0x378] sm:$0xff] %vm1855, %v1841
  %1968 = vst.msk [vmem:[%s5 + $0x380] sm:$0xff] %vm1855, %v1842
  %1969 = vst.msk [vmem:[%s5 + $0x388] sm:$0xff] %vm1855, %v1843
  %1970 = vst.msk [vmem:[%s5 + $0x390] sm:$0xff] %vm1855, %v1844
  %1971 = vst.msk [vmem:[%s5 + $0x398] sm:$0xff] %vm1855, %v1845
  %1972 = vst.msk [vmem:[%s5 + $0x3a0] sm:$0xff] %vm1855, %v1846
  %1973 = vst.msk [vmem:[%s5 + $0x3a8] sm:$0xff] %vm1855, %v1847
  %1974 = vst.msk [vmem:[%s5 + $0x3b0] sm:$0xff] %vm1855, %v1848
  %1975 = vst.msk [vmem:[%s5 + $0x3b8] sm:$0xff] %vm1855, %v1849
  %1976 = vst.msk [vmem:[%s5 + $0x3c0] sm:$0xff] %vm1855, %v1850
  %1977 = vst.msk [vmem:[%s5 + $0x3c8] sm:$0xff] %vm1855, %v1851
  %1978 = vst.msk [vmem:[%s5 + $0x3d0] sm:$0xff] %vm1855, %v1852
  %1979 = vst.msk [vmem:[%s5 + $0x3d8] sm:$0xff] %vm1855, %v1853
  %1980 = vst.msk [vmem:[%s5 + $0x3e0] sm:$0xff] %vm1855, %v1854
  // Predicated region
  $region22: #{value_net_forward.1} parent=0 // pred_check
    _
  $region23: #{value_net_forward.1} parent=0 // pred_check_branch
    %1982 = sbr.rel (0) target = $region25
  $region24: #{value_net_forward.1} parent=0 // pred_region
    _
  $region25: #{value_net_forward.1} parent=0 // pred_fallthru
    _
  // Predicated region
  $region26: #{value_net_forward.1} parent=0 // pred_check
    _
  $region27: #{value_net_forward.1} parent=0 // pred_check_branch
    %1984 = sbr.rel (0) target = $region29
  $region28: #{value_net_forward.1} parent=0 // pred_region
    _
  $region29: #{value_net_forward.1} parent=0 // pred_fallthru
    _

</llo_original>
